<compile_context>
chip_gen: v6e
topology: v6e:2x2x1
jax: 0.10.0
libtpu: 0.0.40
codegen_flags: <defaults>
</compile_context>

<pallas_src>
import functools

import jax
import jax.numpy as jnp
from jax.experimental import pallas as pl
from jax.experimental.pallas import tpu as pltpu


def _round_up(x: int, m: int) -> int:
    return (x + m - 1) // m * m


def ealstm_kernel(xproj_ref, i_gate_ref, w_h_ref, out_ref, h_sc, c_sc):
    """One (batch_tile, time_chunk) grid step of the EA-LSTM recurrence.

    xproj_ref : (T_CHUNK, B_TILE, 3H) f32      hoisted input projections (+biases)
    i_gate_ref: (B_TILE, H)           f32      static (time-invariant) input gate
    w_h_ref   : (H, 3H)               f32/bf16 fused recurrent weights [f|g|o]
    out_ref   : (T_CHUNK, B_TILE, 2H) f32      packed [h | c] per timestep
    h_sc/c_sc : (B_TILE, H)           f32      recurrent state, persists across
                                               the sequential time-chunk axis
    """
    H = h_sc.shape[-1]
    t_chunk = xproj_ref.shape[0]

    # A new batch tile begins when the innermost (time-chunk) index is 0:
    # zero-initialize the recurrent state (scratch persists across grid steps).
    @pl.when(pl.program_id(1) == 0)
    def _():
        h_sc[...] = jnp.zeros_like(h_sc)
        c_sc[...] = jnp.zeros_like(c_sc)

    i_gate = i_gate_ref[...]
    w_h = w_h_ref[...]

    def step(t, carry):
        h, c = carry
        # Single fused recurrent matmul per step; f32 accumulation on the MXU.
        z = xproj_ref[t] + jnp.dot(h.astype(w_h.dtype), w_h,
                                   preferred_element_type=jnp.float32)
        f = jax.nn.sigmoid(z[:, :H])          # forget gate
        g = jnp.tanh(z[:, H:2 * H])           # cell candidates
        o = jax.nn.sigmoid(z[:, 2 * H:])      # output gate
        c_new = f * c + i_gate * g
        h_new = o * jnp.tanh(c_new)
        # One packed store per step instead of two narrow ones.
        out_ref[t] = jnp.concatenate([h_new, c_new], axis=-1)
        return h_new, c_new

    h_fin, c_fin = jax.lax.fori_loop(
        0, t_chunk, step, (h_sc[...], c_sc[...]), unroll=True)
    h_sc[...] = h_fin
    c_sc[...] = c_fin


def ealstm_forward(x_d, x_s, params, hidden_size, *,
                   t_chunk=8, b_tile=8, compute_dtype=jnp.float32):
    """x_d: (B, S, D_dyn) batch_first, x_s: (B, D_stat).
    Returns (h_n, c_n), each (B, S, H), matching the PyTorch module.

    compute_dtype controls only the matmul *input* precision (f32 or bf16 on
    v6e/v7x); state, gate nonlinearities and accumulation stay in f32."""
    B, S, D_dyn = x_d.shape
    H = hidden_size

    # ---- Fuse gate weights -------------------------------------------------
    w_i = jnp.concatenate([params["w_fi"], params["w_gi"], params["w_oi"]],
                          axis=1)                                  # (D_dyn, 3H)
    b_i = jnp.concatenate([params["b_fh"], params["b_gh"], params["b_oh"]],
                          axis=1)                                  # (1, 3H)
    w_h = jnp.concatenate([params["w_fh"], params["w_gh"], params["w_oh"]],
                          axis=1).astype(compute_dtype)            # (H, 3H)

    # ---- Hoisted, non-recurrent precompute (parallel over all timesteps) ---
    # Static input gate (time-invariant), computed once outside the kernel.
    i_gate = jax.nn.sigmoid(
        jnp.dot(x_s.astype(compute_dtype), params["w_ui"].astype(compute_dtype),
                preferred_element_type=jnp.float32) + params["b_ui"])
    # Input projections for ALL timesteps in one big matmul, emitted directly
    # time-major (S, B, 3H) with the h-side biases folded in.
    x_proj = jnp.einsum("bsd,dk->sbk",
                        x_d.astype(compute_dtype), w_i.astype(compute_dtype),
                        preferred_element_type=jnp.float32) + b_i

    # ---- Padding / tiling ---------------------------------------------------
    t_chunk = max(1, min(t_chunk, S))
    b_tile = _round_up(min(b_tile, B), 8)          # sublane-aligned batch tile
    S_pad = _round_up(S, t_chunk)
    B_pad = _round_up(B, b_tile)

    # Zero padding keeps the recurrence exact: padded batch rows are discarded
    # and padded (trailing) timesteps are sliced off and never feed earlier steps.
    x_proj = jnp.pad(x_proj, ((0, S_pad - S), (0, B_pad - B), (0, 0)))
    i_gate = jnp.pad(i_gate, ((0, B_pad - B), (0, 0)))

    grid = (B_pad // b_tile, S_pad // t_chunk)     # time innermost (sequential)

    grid_spec = pltpu.PrefetchScalarGridSpec(
        num_scalar_prefetch=0,
        grid=grid,
        in_specs=[
            pl.BlockSpec((t_chunk, b_tile, 3 * H), lambda b, i: (i, b, 0)),
            pl.BlockSpec((b_tile, H), lambda b, i: (b, 0)),
            # Weights: constant index_map -> DMA'd once and held resident.
            pl.BlockSpec((H, 3 * H), lambda b, i: (0, 0)),
        ],
        out_specs=pl.BlockSpec((t_chunk, b_tile, 2 * H), lambda b, i: (i, b, 0)),
        scratch_shapes=[
            pltpu.VMEM((b_tile, H), jnp.float32),   # h state
            pltpu.VMEM((b_tile, H), jnp.float32),   # c state
        ],
    )

    packed = pl.pallas_call(
        ealstm_kernel,
        out_shape=jax.ShapeDtypeStruct((S_pad, B_pad, 2 * H), jnp.float32),
        grid_spec=grid_spec,
        compiler_params=pltpu.CompilerParams(
            dimension_semantics=("parallel", "arbitrary")),
    )(x_proj, i_gate, w_h)

    # Un-pad, split packed [h|c], and return batch_first like the PyTorch module.
    h_n = jnp.transpose(packed[:S, :B, :H], (1, 0, 2))
    c_n = jnp.transpose(packed[:S, :B, H:], (1, 0, 2))
    return h_n, c_n


def init_params(key, input_size_dyn, input_size_stat, hidden_size):
    """Mirror EALSTMCell.reset_parameters deterministically:
       - *_i weights: orthogonal init (stored transposed as (in, out))
       - *_h weights: identity, bias 0
       - update gate: orthogonal weight, bias 0
    """
    H = hidden_size

    def orthogonal(key, out_f, in_f):
        a = jax.random.normal(key, (max(out_f, in_f), min(out_f, in_f)),
                              jnp.float32)
        q, _ = jnp.linalg.qr(a)
        w = q.T if out_f < in_f else q
        w = w[:out_f, :in_f]                       # (out_f, in_f)
        return w.T                                 # stored as (in_f, out_f)

    keys = jax.random.split(key, 4)
    eye = jnp.eye(H, dtype=jnp.float32)
    zeros_b = jnp.zeros((1, H), jnp.float32)
    return {
        "w_ui": orthogonal(keys[0], H, input_size_stat), "b_ui": zeros_b,
        "w_fi": orthogonal(keys[1], H, input_size_dyn),
        "w_fh": eye, "b_fh": zeros_b,
        "w_gi": orthogonal(keys[2], H, input_size_dyn),
        "w_gh": eye, "b_gh": zeros_b,
        "w_oi": orthogonal(keys[3], H, input_size_dyn),
        "w_oh": eye, "b_oh": zeros_b,
    }


def ealstm_reference(x_d, x_s, params, hidden_size):
    """Pure-JAX reference mirroring the PyTorch forward (per-gate linears)."""
    B, S, _ = x_d.shape
    H = hidden_size
    i = jax.nn.sigmoid(x_s @ params["w_ui"] + params["b_ui"])
    h = jnp.zeros((B, H), jnp.float32)
    c = jnp.zeros((B, H), jnp.float32)
    hs, cs = [], []
    for t in range(S):
        xt = x_d[:, t, :]
        f = jax.nn.sigmoid(xt @ params["w_fi"] + h @ params["w_fh"] + params["b_fh"])
        g = jnp.tanh(xt @ params["w_gi"] + h @ params["w_gh"] + params["b_gh"])
        o = jax.nn.sigmoid(xt @ params["w_oi"] + h @ params["w_oh"] + params["b_oh"])
        c = f * c + i * g
        h = o * jnp.tanh(c)
        hs.append(h)
        cs.append(c)
    return jnp.stack(hs, 1), jnp.stack(cs, 1)


if __name__ == "__main__":
    B, S = 2, 12                      # exercises batch padding (2->8) and
    D_DYN, D_STAT, H = 4, 6, 32       # time padding / multi-chunk carry (12->16)

    key = jax.random.PRNGKey(0)
    k_xd, k_xs, k_p = jax.random.split(key, 3)
    x_d = jax.random.normal(k_xd, (B, S, D_DYN), jnp.float32)
    x_s = jax.random.normal(k_xs, (B, D_STAT), jnp.float32)
    params = init_params(k_p, D_DYN, D_STAT, H)

    h_ref, c_ref = ealstm_reference(x_d, x_s, params, H)

    # f32 path: numerically faithful to the PyTorch forward.
    # (bf16 matmul-input path is available via compute_dtype=jnp.bfloat16 on
    #  real v6e/v7x hardware; not exercised here because the CPU/interpret
    #  emulator lacks a BF16xBF16->F32 dot thunk.)
    fwd_f32 = jax.jit(functools.partial(
        ealstm_forward, hidden_size=H, t_chunk=8, b_tile=8,
        compute_dtype=jnp.float32))
    h32, c32 = fwd_f32(x_d, x_s, params)
    jax.block_until_ready((h32, c32))
    assert h32.shape == (B, S, H) and c32.shape == (B, S, H)
    assert jnp.allclose(h32, h_ref, atol=1e-4), "f32 h mismatch vs reference"
    assert jnp.allclose(c32, c_ref, atol=1e-4), "f32 c mismatch vs reference"

    print("KERNEL_OK")
</pallas_src>

<mosaic_0001>
module attributes {stable_mosaic.version = 11 : i64} {
  func.func @ealstm_kernel(%arg0: i32, %arg1: i32, %arg2: memref<8x8x96xf32, #tpu.memory_space<vmem>>, %arg3: memref<8x32xf32, #tpu.memory_space<vmem>>, %arg4: memref<32x96xf32, #tpu.memory_space<vmem>>, %arg5: memref<8x8x64xf32, #tpu.memory_space<vmem>>, %arg6: memref<8x32xf32, #tpu.memory_space<vmem>>, %arg7: memref<8x32xf32, #tpu.memory_space<vmem>>) attributes {dimension_semantics = [#tpu.dimension_semantics<parallel>, #tpu.dimension_semantics<arbitrary>], iteration_bounds = array<i64: 1, 2>, scalar_prefetch = 0 : i64, scratch_operands = 2 : i64, tpu.core_type = #tpu.core_type<tc>, window_params = [{transform_indices = @transform_0, window_bounds = array<i64: 8, 8, 96>}, {transform_indices = @transform_1, window_bounds = array<i64: 8, 32>}, {pipeline_mode = #tpu.pipeline_mode<synchronous>, transform_indices = @transform_2, window_bounds = array<i64: 32, 96>}, {transform_indices = @transform_3, window_bounds = array<i64: 8, 8, 64>}]} {
    %c0_i32 = arith.constant 0 : i32
    %0 = arith.cmpi eq, %arg1, %c0_i32 : i32
    %1 = arith.extui %0 : i1 to i32
    %c0_i32_0 = arith.constant 0 : i32
    %2 = arith.cmpi ne, %1, %c0_i32_0 : i32
    scf.if %2 {
      %cst_68 = arith.constant 0.000000e+00 : f32
      %241 = vector.broadcast %cst_68 : f32 to vector<8x32xf32>
      %c0_69 = arith.constant 0 : index
      %c0_70 = arith.constant 0 : index
      %242 = vector.load %arg6[%c0_69, %c0_70] : memref<8x32xf32, #tpu.memory_space<vmem>>, vector<8x32xf32>
      tpu.vector_store %arg6[%c0_69, %c0_70], %241 {strides = array<i32>} : memref<8x32xf32, #tpu.memory_space<vmem>>, vector<8x32xf32>,
      %cst_71 = arith.constant 0.000000e+00 : f32
      %243 = vector.broadcast %cst_71 : f32 to vector<8x32xf32>
      %c0_72 = arith.constant 0 : index
      %c0_73 = arith.constant 0 : index
      %244 = vector.load %arg7[%c0_72, %c0_73] : memref<8x32xf32, #tpu.memory_space<vmem>>, vector<8x32xf32>
      tpu.vector_store %arg7[%c0_72, %c0_73], %243 {strides = array<i32>} : memref<8x32xf32, #tpu.memory_space<vmem>>, vector<8x32xf32>,
    } else {
    }
    %c0 = arith.constant 0 : index
    %c0_1 = arith.constant 0 : index
    %3 = vector.load %arg3[%c0, %c0_1] : memref<8x32xf32, #tpu.memory_space<vmem>>, vector<8x32xf32>
    %c0_2 = arith.constant 0 : index
    %c0_3 = arith.constant 0 : index
    %4 = vector.load %arg4[%c0_2, %c0_3] : memref<32x96xf32, #tpu.memory_space<vmem>>, vector<32x96xf32>
    %c0_4 = arith.constant 0 : index
    %c0_5 = arith.constant 0 : index
    %5 = vector.load %arg6[%c0_4, %c0_5] : memref<8x32xf32, #tpu.memory_space<vmem>>, vector<8x32xf32>
    %c0_6 = arith.constant 0 : index
    %c0_7 = arith.constant 0 : index
    %6 = vector.load %arg7[%c0_6, %c0_7] : memref<8x32xf32, #tpu.memory_space<vmem>>, vector<8x32xf32>
    %c0_i32_8 = arith.constant 0 : i32
    %7 = arith.index_cast %c0_i32_8 : i32 to index
    %c0_9 = arith.constant 0 : index
    %c0_10 = arith.constant 0 : index
    %8 = vector.load %arg2[%7, %c0_9, %c0_10] : memref<8x8x96xf32, #tpu.memory_space<vmem>>, vector<1x8x96xf32>
    %9 = vector.shape_cast %8 : vector<1x8x96xf32> to vector<8x96xf32>
    %cst = arith.constant dense<0.000000e+00> : vector<8x96xf32>
    %10 = tpu.matmul %5, %4, %cst {dimension_numbers = #tpu.dot_dimension_numbers<[1], [0], [0], [1], [0, 0, 1, 1], [], []>} : vector<8x32xf32>, vector<32x96xf32>, vector<8x96xf32> -> vector<8x96xf32>
    %11 = arith.addf %9, %10 : vector<8x96xf32>
    %12 = vector.extract_strided_slice %11 {offsets = [0, 0], sizes = [8, 32], strides = [1, 1]} : vector<8x96xf32> to vector<8x32xf32>
    %13 = arith.negf %12 : vector<8x32xf32>
    %14 = math.exp %13 : vector<8x32xf32>
    %cst_11 = arith.constant 1.000000e+00 : f32
    %15 = vector.broadcast %cst_11 : f32 to vector<8x32xf32>
    %16 = arith.addf %15, %14 : vector<8x32xf32>
    %17 = arith.divf %15, %16 : vector<8x32xf32>
    %18 = vector.extract_strided_slice %11 {offsets = [0, 32], sizes = [8, 32], strides = [1, 1]} : vector<8x96xf32> to vector<8x32xf32>
    %19 = math.tanh %18 : vector<8x32xf32>
    %20 = vector.extract_strided_slice %11 {offsets = [0, 64], sizes = [8, 32], strides = [1, 1]} : vector<8x96xf32> to vector<8x32xf32>
    %21 = arith.negf %20 : vector<8x32xf32>
    %22 = math.exp %21 : vector<8x32xf32>
    %cst_12 = arith.constant 1.000000e+00 : f32
    %23 = vector.broadcast %cst_12 : f32 to vector<8x32xf32>
    %24 = arith.addf %23, %22 : vector<8x32xf32>
    %25 = arith.divf %23, %24 : vector<8x32xf32>
    %26 = arith.mulf %17, %6 : vector<8x32xf32>
    %27 = arith.mulf %3, %19 : vector<8x32xf32>
    %28 = arith.addf %26, %27 : vector<8x32xf32>
    %29 = math.tanh %28 : vector<8x32xf32>
    %30 = arith.mulf %25, %29 : vector<8x32xf32>
    %31 = tpu.concatenate %30, %28 in 1 : vector<8x32xf32>, vector<8x32xf32> -> vector<8x64xf32>
    %32 = arith.index_cast %c0_i32_8 : i32 to index
    %c0_13 = arith.constant 0 : index
    %c0_14 = arith.constant 0 : index
    %33 = vector.load %arg5[%32, %c0_13, %c0_14] : memref<8x8x64xf32, #tpu.memory_space<vmem>>, vector<1x8x64xf32>
    %34 = vector.shape_cast %33 : vector<1x8x64xf32> to vector<8x64xf32>
    %35 = vector.shape_cast %31 : vector<8x64xf32> to vector<1x8x64xf32>
    tpu.vector_store %arg5[%32, %c0_13, %c0_14], %35 {strides = array<i32>} : memref<8x8x64xf32, #tpu.memory_space<vmem>>, vector<1x8x64xf32>,
    %c1_i32 = arith.constant 1 : i32
    %36 = arith.index_cast %c1_i32 : i32 to index
    %c0_15 = arith.constant 0 : index
    %c0_16 = arith.constant 0 : index
    %37 = vector.load %arg2[%36, %c0_15, %c0_16] : memref<8x8x96xf32, #tpu.memory_space<vmem>>, vector<1x8x96xf32>
    %38 = vector.shape_cast %37 : vector<1x8x96xf32> to vector<8x96xf32>
    %cst_17 = arith.constant dense<0.000000e+00> : vector<8x96xf32>
    %39 = tpu.matmul %30, %4, %cst_17 {dimension_numbers = #tpu.dot_dimension_numbers<[1], [0], [0], [1], [0, 0, 1, 1], [], []>} : vector<8x32xf32>, vector<32x96xf32>, vector<8x96xf32> -> vector<8x96xf32>
    %40 = arith.addf %38, %39 : vector<8x96xf32>
    %41 = vector.extract_strided_slice %40 {offsets = [0, 0], sizes = [8, 32], strides = [1, 1]} : vector<8x96xf32> to vector<8x32xf32>
    %42 = arith.negf %41 : vector<8x32xf32>
    %43 = math.exp %42 : vector<8x32xf32>
    %cst_18 = arith.constant 1.000000e+00 : f32
    %44 = vector.broadcast %cst_18 : f32 to vector<8x32xf32>
    %45 = arith.addf %44, %43 : vector<8x32xf32>
    %46 = arith.divf %44, %45 : vector<8x32xf32>
    %47 = vector.extract_strided_slice %40 {offsets = [0, 32], sizes = [8, 32], strides = [1, 1]} : vector<8x96xf32> to vector<8x32xf32>
    %48 = math.tanh %47 : vector<8x32xf32>
    %49 = vector.extract_strided_slice %40 {offsets = [0, 64], sizes = [8, 32], strides = [1, 1]} : vector<8x96xf32> to vector<8x32xf32>
    %50 = arith.negf %49 : vector<8x32xf32>
    %51 = math.exp %50 : vector<8x32xf32>
    %cst_19 = arith.constant 1.000000e+00 : f32
    %52 = vector.broadcast %cst_19 : f32 to vector<8x32xf32>
    %53 = arith.addf %52, %51 : vector<8x32xf32>
    %54 = arith.divf %52, %53 : vector<8x32xf32>
    %55 = arith.mulf %46, %28 : vector<8x32xf32>
    %56 = arith.mulf %3, %48 : vector<8x32xf32>
    %57 = arith.addf %55, %56 : vector<8x32xf32>
    %58 = math.tanh %57 : vector<8x32xf32>
    %59 = arith.mulf %54, %58 : vector<8x32xf32>
    %60 = tpu.concatenate %59, %57 in 1 : vector<8x32xf32>, vector<8x32xf32> -> vector<8x64xf32>
    %61 = arith.index_cast %c1_i32 : i32 to index
    %c0_20 = arith.constant 0 : index
    %c0_21 = arith.constant 0 : index
    %62 = vector.load %arg5[%61, %c0_20, %c0_21] : memref<8x8x64xf32, #tpu.memory_space<vmem>>, vector<1x8x64xf32>
    %63 = vector.shape_cast %62 : vector<1x8x64xf32> to vector<8x64xf32>
    %64 = vector.shape_cast %60 : vector<8x64xf32> to vector<1x8x64xf32>
    tpu.vector_store %arg5[%61, %c0_20, %c0_21], %64 {strides = array<i32>} : memref<8x8x64xf32, #tpu.memory_space<vmem>>, vector<1x8x64xf32>,
    %c2_i32 = arith.constant 2 : i32
    %65 = arith.index_cast %c2_i32 : i32 to index
    %c0_22 = arith.constant 0 : index
    %c0_23 = arith.constant 0 : index
    %66 = vector.load %arg2[%65, %c0_22, %c0_23] : memref<8x8x96xf32, #tpu.memory_space<vmem>>, vector<1x8x96xf32>
    %67 = vector.shape_cast %66 : vector<1x8x96xf32> to vector<8x96xf32>
    %cst_24 = arith.constant dense<0.000000e+00> : vector<8x96xf32>
    %68 = tpu.matmul %59, %4, %cst_24 {dimension_numbers = #tpu.dot_dimension_numbers<[1], [0], [0], [1], [0, 0, 1, 1], [], []>} : vector<8x32xf32>, vector<32x96xf32>, vector<8x96xf32> -> vector<8x96xf32>
    %69 = arith.addf %67, %68 : vector<8x96xf32>
    %70 = vector.extract_strided_slice %69 {offsets = [0, 0], sizes = [8, 32], strides = [1, 1]} : vector<8x96xf32> to vector<8x32xf32>
    %71 = arith.negf %70 : vector<8x32xf32>
    %72 = math.exp %71 : vector<8x32xf32>
    %cst_25 = arith.constant 1.000000e+00 : f32
    %73 = vector.broadcast %cst_25 : f32 to vector<8x32xf32>
    %74 = arith.addf %73, %72 : vector<8x32xf32>
    %75 = arith.divf %73, %74 : vector<8x32xf32>
    %76 = vector.extract_strided_slice %69 {offsets = [0, 32], sizes = [8, 32], strides = [1, 1]} : vector<8x96xf32> to vector<8x32xf32>
    %77 = math.tanh %76 : vector<8x32xf32>
    %78 = vector.extract_strided_slice %69 {offsets = [0, 64], sizes = [8, 32], strides = [1, 1]} : vector<8x96xf32> to vector<8x32xf32>
    %79 = arith.negf %78 : vector<8x32xf32>
    %80 = math.exp %79 : vector<8x32xf32>
    %cst_26 = arith.constant 1.000000e+00 : f32
    %81 = vector.broadcast %cst_26 : f32 to vector<8x32xf32>
    %82 = arith.addf %81, %80 : vector<8x32xf32>
    %83 = arith.divf %81, %82 : vector<8x32xf32>
    %84 = arith.mulf %75, %57 : vector<8x32xf32>
    %85 = arith.mulf %3, %77 : vector<8x32xf32>
    %86 = arith.addf %84, %85 : vector<8x32xf32>
    %87 = math.tanh %86 : vector<8x32xf32>
    %88 = arith.mulf %83, %87 : vector<8x32xf32>
    %89 = tpu.concatenate %88, %86 in 1 : vector<8x32xf32>, vector<8x32xf32> -> vector<8x64xf32>
    %90 = arith.index_cast %c2_i32 : i32 to index
    %c0_27 = arith.constant 0 : index
    %c0_28 = arith.constant 0 : index
    %91 = vector.load %arg5[%90, %c0_27, %c0_28] : memref<8x8x64xf32, #tpu.memory_space<vmem>>, vector<1x8x64xf32>
    %92 = vector.shape_cast %91 : vector<1x8x64xf32> to vector<8x64xf32>
    %93 = vector.shape_cast %89 : vector<8x64xf32> to vector<1x8x64xf32>
    tpu.vector_store %arg5[%90, %c0_27, %c0_28], %93 {strides = array<i32>} : memref<8x8x64xf32, #tpu.memory_space<vmem>>, vector<1x8x64xf32>,
    %c3_i32 = arith.constant 3 : i32
    %94 = arith.index_cast %c3_i32 : i32 to index
    %c0_29 = arith.constant 0 : index
    %c0_30 = arith.constant 0 : index
    %95 = vector.load %arg2[%94, %c0_29, %c0_30] : memref<8x8x96xf32, #tpu.memory_space<vmem>>, vector<1x8x96xf32>
    %96 = vector.shape_cast %95 : vector<1x8x96xf32> to vector<8x96xf32>
    %cst_31 = arith.constant dense<0.000000e+00> : vector<8x96xf32>
    %97 = tpu.matmul %88, %4, %cst_31 {dimension_numbers = #tpu.dot_dimension_numbers<[1], [0], [0], [1], [0, 0, 1, 1], [], []>} : vector<8x32xf32>, vector<32x96xf32>, vector<8x96xf32> -> vector<8x96xf32>
    %98 = arith.addf %96, %97 : vector<8x96xf32>
    %99 = vector.extract_strided_slice %98 {offsets = [0, 0], sizes = [8, 32], strides = [1, 1]} : vector<8x96xf32> to vector<8x32xf32>
    %100 = arith.negf %99 : vector<8x32xf32>
    %101 = math.exp %100 : vector<8x32xf32>
    %cst_32 = arith.constant 1.000000e+00 : f32
    %102 = vector.broadcast %cst_32 : f32 to vector<8x32xf32>
    %103 = arith.addf %102, %101 : vector<8x32xf32>
    %104 = arith.divf %102, %103 : vector<8x32xf32>
    %105 = vector.extract_strided_slice %98 {offsets = [0, 32], sizes = [8, 32], strides = [1, 1]} : vector<8x96xf32> to vector<8x32xf32>
    %106 = math.tanh %105 : vector<8x32xf32>
    %107 = vector.extract_strided_slice %98 {offsets = [0, 64], sizes = [8, 32], strides = [1, 1]} : vector<8x96xf32> to vector<8x32xf32>
    %108 = arith.negf %107 : vector<8x32xf32>
    %109 = math.exp %108 : vector<8x32xf32>
    %cst_33 = arith.constant 1.000000e+00 : f32
    %110 = vector.broadcast %cst_33 : f32 to vector<8x32xf32>
    %111 = arith.addf %110, %109 : vector<8x32xf32>
    %112 = arith.divf %110, %111 : vector<8x32xf32>
    %113 = arith.mulf %104, %86 : vector<8x32xf32>
    %114 = arith.mulf %3, %106 : vector<8x32xf32>
    %115 = arith.addf %113, %114 : vector<8x32xf32>
    %116 = math.tanh %115 : vector<8x32xf32>
    %117 = arith.mulf %112, %116 : vector<8x32xf32>
    %118 = tpu.concatenate %117, %115 in 1 : vector<8x32xf32>, vector<8x32xf32> -> vector<8x64xf32>
    %119 = arith.index_cast %c3_i32 : i32 to index
    %c0_34 = arith.constant 0 : index
    %c0_35 = arith.constant 0 : index
    %120 = vector.load %arg5[%119, %c0_34, %c0_35] : memref<8x8x64xf32, #tpu.memory_space<vmem>>, vector<1x8x64xf32>
    %121 = vector.shape_cast %120 : vector<1x8x64xf32> to vector<8x64xf32>
    %122 = vector.shape_cast %118 : vector<8x64xf32> to vector<1x8x64xf32>
    tpu.vector_store %arg5[%119, %c0_34, %c0_35], %122 {strides = array<i32>} : memref<8x8x64xf32, #tpu.memory_space<vmem>>, vector<1x8x64xf32>,
    %c4_i32 = arith.constant 4 : i32
    %123 = arith.index_cast %c4_i32 : i32 to index
    %c0_36 = arith.constant 0 : index
    %c0_37 = arith.constant 0 : index
    %124 = vector.load %arg2[%123, %c0_36, %c0_37] : memref<8x8x96xf32, #tpu.memory_space<vmem>>, vector<1x8x96xf32>
    %125 = vector.shape_cast %124 : vector<1x8x96xf32> to vector<8x96xf32>
    %cst_38 = arith.constant dense<0.000000e+00> : vector<8x96xf32>
    %126 = tpu.matmul %117, %4, %cst_38 {dimension_numbers = #tpu.dot_dimension_numbers<[1], [0], [0], [1], [0, 0, 1, 1], [], []>} : vector<8x32xf32>, vector<32x96xf32>, vector<8x96xf32> -> vector<8x96xf32>
    %127 = arith.addf %125, %126 : vector<8x96xf32>
    %128 = vector.extract_strided_slice %127 {offsets = [0, 0], sizes = [8, 32], strides = [1, 1]} : vector<8x96xf32> to vector<8x32xf32>
    %129 = arith.negf %128 : vector<8x32xf32>
    %130 = math.exp %129 : vector<8x32xf32>
    %cst_39 = arith.constant 1.000000e+00 : f32
    %131 = vector.broadcast %cst_39 : f32 to vector<8x32xf32>
    %132 = arith.addf %131, %130 : vector<8x32xf32>
    %133 = arith.divf %131, %132 : vector<8x32xf32>
    %134 = vector.extract_strided_slice %127 {offsets = [0, 32], sizes = [8, 32], strides = [1, 1]} : vector<8x96xf32> to vector<8x32xf32>
    %135 = math.tanh %134 : vector<8x32xf32>
    %136 = vector.extract_strided_slice %127 {offsets = [0, 64], sizes = [8, 32], strides = [1, 1]} : vector<8x96xf32> to vector<8x32xf32>
    %137 = arith.negf %136 : vector<8x32xf32>
    %138 = math.exp %137 : vector<8x32xf32>
    %cst_40 = arith.constant 1.000000e+00 : f32
    %139 = vector.broadcast %cst_40 : f32 to vector<8x32xf32>
    %140 = arith.addf %139, %138 : vector<8x32xf32>
    %141 = arith.divf %139, %140 : vector<8x32xf32>
    %142 = arith.mulf %133, %115 : vector<8x32xf32>
    %143 = arith.mulf %3, %135 : vector<8x32xf32>
    %144 = arith.addf %142, %143 : vector<8x32xf32>
    %145 = math.tanh %144 : vector<8x32xf32>
    %146 = arith.mulf %141, %145 : vector<8x32xf32>
    %147 = tpu.concatenate %146, %144 in 1 : vector<8x32xf32>, vector<8x32xf32> -> vector<8x64xf32>
    %148 = arith.index_cast %c4_i32 : i32 to index
    %c0_41 = arith.constant 0 : index
    %c0_42 = arith.constant 0 : index
    %149 = vector.load %arg5[%148, %c0_41, %c0_42] : memref<8x8x64xf32, #tpu.memory_space<vmem>>, vector<1x8x64xf32>
    %150 = vector.shape_cast %149 : vector<1x8x64xf32> to vector<8x64xf32>
    %151 = vector.shape_cast %147 : vector<8x64xf32> to vector<1x8x64xf32>
    tpu.vector_store %arg5[%148, %c0_41, %c0_42], %151 {strides = array<i32>} : memref<8x8x64xf32, #tpu.memory_space<vmem>>, vector<1x8x64xf32>,
    %c5_i32 = arith.constant 5 : i32
    %152 = arith.index_cast %c5_i32 : i32 to index
    %c0_43 = arith.constant 0 : index
    %c0_44 = arith.constant 0 : index
    %153 = vector.load %arg2[%152, %c0_43, %c0_44] : memref<8x8x96xf32, #tpu.memory_space<vmem>>, vector<1x8x96xf32>
    %154 = vector.shape_cast %153 : vector<1x8x96xf32> to vector<8x96xf32>
    %cst_45 = arith.constant dense<0.000000e+00> : vector<8x96xf32>
    %155 = tpu.matmul %146, %4, %cst_45 {dimension_numbers = #tpu.dot_dimension_numbers<[1], [0], [0], [1], [0, 0, 1, 1], [], []>} : vector<8x32xf32>, vector<32x96xf32>, vector<8x96xf32> -> vector<8x96xf32>
    %156 = arith.addf %154, %155 : vector<8x96xf32>
    %157 = vector.extract_strided_slice %156 {offsets = [0, 0], sizes = [8, 32], strides = [1, 1]} : vector<8x96xf32> to vector<8x32xf32>
    %158 = arith.negf %157 : vector<8x32xf32>
    %159 = math.exp %158 : vector<8x32xf32>
    %cst_46 = arith.constant 1.000000e+00 : f32
    %160 = vector.broadcast %cst_46 : f32 to vector<8x32xf32>
    %161 = arith.addf %160, %159 : vector<8x32xf32>
    %162 = arith.divf %160, %161 : vector<8x32xf32>
    %163 = vector.extract_strided_slice %156 {offsets = [0, 32], sizes = [8, 32], strides = [1, 1]} : vector<8x96xf32> to vector<8x32xf32>
    %164 = math.tanh %163 : vector<8x32xf32>
    %165 = vector.extract_strided_slice %156 {offsets = [0, 64], sizes = [8, 32], strides = [1, 1]} : vector<8x96xf32> to vector<8x32xf32>
    %166 = arith.negf %165 : vector<8x32xf32>
    %167 = math.exp %166 : vector<8x32xf32>
    %cst_47 = arith.constant 1.000000e+00 : f32
    %168 = vector.broadcast %cst_47 : f32 to vector<8x32xf32>
    %169 = arith.addf %168, %167 : vector<8x32xf32>
    %170 = arith.divf %168, %169 : vector<8x32xf32>
    %171 = arith.mulf %162, %144 : vector<8x32xf32>
    %172 = arith.mulf %3, %164 : vector<8x32xf32>
    %173 = arith.addf %171, %172 : vector<8x32xf32>
    %174 = math.tanh %173 : vector<8x32xf32>
    %175 = arith.mulf %170, %174 : vector<8x32xf32>
    %176 = tpu.concatenate %175, %173 in 1 : vector<8x32xf32>, vector<8x32xf32> -> vector<8x64xf32>
    %177 = arith.index_cast %c5_i32 : i32 to index
    %c0_48 = arith.constant 0 : index
    %c0_49 = arith.constant 0 : index
    %178 = vector.load %arg5[%177, %c0_48, %c0_49] : memref<8x8x64xf32, #tpu.memory_space<vmem>>, vector<1x8x64xf32>
    %179 = vector.shape_cast %178 : vector<1x8x64xf32> to vector<8x64xf32>
    %180 = vector.shape_cast %176 : vector<8x64xf32> to vector<1x8x64xf32>
    tpu.vector_store %arg5[%177, %c0_48, %c0_49], %180 {strides = array<i32>} : memref<8x8x64xf32, #tpu.memory_space<vmem>>, vector<1x8x64xf32>,
    %c6_i32 = arith.constant 6 : i32
    %181 = arith.index_cast %c6_i32 : i32 to index
    %c0_50 = arith.constant 0 : index
    %c0_51 = arith.constant 0 : index
    %182 = vector.load %arg2[%181, %c0_50, %c0_51] : memref<8x8x96xf32, #tpu.memory_space<vmem>>, vector<1x8x96xf32>
    %183 = vector.shape_cast %182 : vector<1x8x96xf32> to vector<8x96xf32>
    %cst_52 = arith.constant dense<0.000000e+00> : vector<8x96xf32>
    %184 = tpu.matmul %175, %4, %cst_52 {dimension_numbers = #tpu.dot_dimension_numbers<[1], [0], [0], [1], [0, 0, 1, 1], [], []>} : vector<8x32xf32>, vector<32x96xf32>, vector<8x96xf32> -> vector<8x96xf32>
    %185 = arith.addf %183, %184 : vector<8x96xf32>
    %186 = vector.extract_strided_slice %185 {offsets = [0, 0], sizes = [8, 32], strides = [1, 1]} : vector<8x96xf32> to vector<8x32xf32>
    %187 = arith.negf %186 : vector<8x32xf32>
    %188 = math.exp %187 : vector<8x32xf32>
    %cst_53 = arith.constant 1.000000e+00 : f32
    %189 = vector.broadcast %cst_53 : f32 to vector<8x32xf32>
    %190 = arith.addf %189, %188 : vector<8x32xf32>
    %191 = arith.divf %189, %190 : vector<8x32xf32>
    %192 = vector.extract_strided_slice %185 {offsets = [0, 32], sizes = [8, 32], strides = [1, 1]} : vector<8x96xf32> to vector<8x32xf32>
    %193 = math.tanh %192 : vector<8x32xf32>
    %194 = vector.extract_strided_slice %185 {offsets = [0, 64], sizes = [8, 32], strides = [1, 1]} : vector<8x96xf32> to vector<8x32xf32>
    %195 = arith.negf %194 : vector<8x32xf32>
    %196 = math.exp %195 : vector<8x32xf32>
    %cst_54 = arith.constant 1.000000e+00 : f32
    %197 = vector.broadcast %cst_54 : f32 to vector<8x32xf32>
    %198 = arith.addf %197, %196 : vector<8x32xf32>
    %199 = arith.divf %197, %198 : vector<8x32xf32>
    %200 = arith.mulf %191, %173 : vector<8x32xf32>
    %201 = arith.mulf %3, %193 : vector<8x32xf32>
    %202 = arith.addf %200, %201 : vector<8x32xf32>
    %203 = math.tanh %202 : vector<8x32xf32>
    %204 = arith.mulf %199, %203 : vector<8x32xf32>
    %205 = tpu.concatenate %204, %202 in 1 : vector<8x32xf32>, vector<8x32xf32> -> vector<8x64xf32>
    %206 = arith.index_cast %c6_i32 : i32 to index
    %c0_55 = arith.constant 0 : index
    %c0_56 = arith.constant 0 : index
    %207 = vector.load %arg5[%206, %c0_55, %c0_56] : memref<8x8x64xf32, #tpu.memory_space<vmem>>, vector<1x8x64xf32>
    %208 = vector.shape_cast %207 : vector<1x8x64xf32> to vector<8x64xf32>
    %209 = vector.shape_cast %205 : vector<8x64xf32> to vector<1x8x64xf32>
    tpu.vector_store %arg5[%206, %c0_55, %c0_56], %209 {strides = array<i32>} : memref<8x8x64xf32, #tpu.memory_space<vmem>>, vector<1x8x64xf32>,
    %c7_i32 = arith.constant 7 : i32
    %210 = arith.index_cast %c7_i32 : i32 to index
    %c0_57 = arith.constant 0 : index
    %c0_58 = arith.constant 0 : index
    %211 = vector.load %arg2[%210, %c0_57, %c0_58] : memref<8x8x96xf32, #tpu.memory_space<vmem>>, vector<1x8x96xf32>
    %212 = vector.shape_cast %211 : vector<1x8x96xf32> to vector<8x96xf32>
    %cst_59 = arith.constant dense<0.000000e+00> : vector<8x96xf32>
    %213 = tpu.matmul %204, %4, %cst_59 {dimension_numbers = #tpu.dot_dimension_numbers<[1], [0], [0], [1], [0, 0, 1, 1], [], []>} : vector<8x32xf32>, vector<32x96xf32>, vector<8x96xf32> -> vector<8x96xf32>
    %214 = arith.addf %212, %213 : vector<8x96xf32>
    %215 = vector.extract_strided_slice %214 {offsets = [0, 0], sizes = [8, 32], strides = [1, 1]} : vector<8x96xf32> to vector<8x32xf32>
    %216 = arith.negf %215 : vector<8x32xf32>
    %217 = math.exp %216 : vector<8x32xf32>
    %cst_60 = arith.constant 1.000000e+00 : f32
    %218 = vector.broadcast %cst_60 : f32 to vector<8x32xf32>
    %219 = arith.addf %218, %217 : vector<8x32xf32>
    %220 = arith.divf %218, %219 : vector<8x32xf32>
    %221 = vector.extract_strided_slice %214 {offsets = [0, 32], sizes = [8, 32], strides = [1, 1]} : vector<8x96xf32> to vector<8x32xf32>
    %222 = math.tanh %221 : vector<8x32xf32>
    %223 = vector.extract_strided_slice %214 {offsets = [0, 64], sizes = [8, 32], strides = [1, 1]} : vector<8x96xf32> to vector<8x32xf32>
    %224 = arith.negf %223 : vector<8x32xf32>
    %225 = math.exp %224 : vector<8x32xf32>
    %cst_61 = arith.constant 1.000000e+00 : f32
    %226 = vector.broadcast %cst_61 : f32 to vector<8x32xf32>
    %227 = arith.addf %226, %225 : vector<8x32xf32>
    %228 = arith.divf %226, %227 : vector<8x32xf32>
    %229 = arith.mulf %220, %202 : vector<8x32xf32>
    %230 = arith.mulf %3, %222 : vector<8x32xf32>
    %231 = arith.addf %229, %230 : vector<8x32xf32>
    %232 = math.tanh %231 : vector<8x32xf32>
    %233 = arith.mulf %228, %232 : vector<8x32xf32>
    %234 = tpu.concatenate %233, %231 in 1 : vector<8x32xf32>, vector<8x32xf32> -> vector<8x64xf32>
    %235 = arith.index_cast %c7_i32 : i32 to index
    %c0_62 = arith.constant 0 : index
    %c0_63 = arith.constant 0 : index
    %236 = vector.load %arg5[%235, %c0_62, %c0_63] : memref<8x8x64xf32, #tpu.memory_space<vmem>>, vector<1x8x64xf32>
    %237 = vector.shape_cast %236 : vector<1x8x64xf32> to vector<8x64xf32>
    %238 = vector.shape_cast %234 : vector<8x64xf32> to vector<1x8x64xf32>
    tpu.vector_store %arg5[%235, %c0_62, %c0_63], %238 {strides = array<i32>} : memref<8x8x64xf32, #tpu.memory_space<vmem>>, vector<1x8x64xf32>,
    %c8_i32 = arith.constant 8 : i32
    %c0_64 = arith.constant 0 : index
    %c0_65 = arith.constant 0 : index
    %239 = vector.load %arg6[%c0_64, %c0_65] : memref<8x32xf32, #tpu.memory_space<vmem>>, vector<8x32xf32>
    tpu.vector_store %arg6[%c0_64, %c0_65], %233 {strides = array<i32>} : memref<8x32xf32, #tpu.memory_space<vmem>>, vector<8x32xf32>,
    %c0_66 = arith.constant 0 : index
    %c0_67 = arith.constant 0 : index
    %240 = vector.load %arg7[%c0_66, %c0_67] : memref<8x32xf32, #tpu.memory_space<vmem>>, vector<8x32xf32>
    tpu.vector_store %arg7[%c0_66, %c0_67], %231 {strides = array<i32>} : memref<8x32xf32, #tpu.memory_space<vmem>>, vector<8x32xf32>,
    return
  }
  func.func @transform_0(%arg0: i32, %arg1: i32) -> (i32, i32, i32) {
    %c0_i32 = arith.constant 0 : i32
    %c0_i32_0 = arith.constant 0 : i32
    return %arg1, %arg0, %c0_i32 : i32, i32, i32
  }
  func.func @transform_1(%arg0: i32, %arg1: i32) -> (i32, i32) {
    %c0_i32 = arith.constant 0 : i32
    %c0_i32_0 = arith.constant 0 : i32
    return %arg0, %c0_i32 : i32, i32
  }
  func.func @transform_2(%arg0: i32, %arg1: i32) -> (i32, i32) {
    %c0_i32 = arith.constant 0 : i32
    %c0_i32_0 = arith.constant 0 : i32
    %c0_i32_1 = arith.constant 0 : i32
    return %c0_i32, %c0_i32_0 : i32, i32
  }
  func.func @transform_3(%arg0: i32, %arg1: i32) -> (i32, i32, i32) {
    %c0_i32 = arith.constant 0 : i32
    %c0_i32_0 = arith.constant 0 : i32
    return %arg1, %arg0, %c0_i32 : i32, i32, i32
  }
}

</mosaic_0001>

<llo_original>
// kernel: ealstm_forward.1
$region0: #{ealstm_forward.1}
  #allocation0 [shape = 'u32[]', space=smem, size = 0x4, offset = 0x4, fixed_abs, tag = 'smem constant byte address 0x4 - core index']
  #allocation1 [shape = 'u32[144,128]{1,0:T(1,128)}', space=vmem, size = 0x12000, scoped, tag = 'internal scratch']
  #allocation2 [shape = 'f32[8,32]{1,0:T(8,128)}', space=vmem, size = 0x1000, scoped, tag = 'scratch operand']
  #allocation3 [shape = 'f32[8,32]{1,0:T(8,128)}', space=vmem, size = 0x1000, scoped, tag = 'scratch operand']
  %s0 = inlined_call_operand.vmem [shape: f32[16,8,96], index: 0, kind: input, shape index: {}]
  %s1 = inlined_call_operand.vmem [shape: f32[8,32], index: 1, kind: input, shape index: {}]
  %s2 = inlined_call_operand.vmem [shape: f32[32,96], index: 2, kind: input, shape index: {}]
  %s3 = inlined_call_operand.vmem [shape: f32[16,8,64], index: 3, kind: output, shape index: {}]
  %s4 = sld [smem:[#allocation0]]
  $region49: #{ealstm_forward.1} parent=0
    _
  %s6 = ssub.s32 1, %s4
  %s7 = scalar_select 0, %s6, %s4
  loop: start=0, step=1, limit=4
  $region2: #{ealstm_forward.1} parent=0 // loop_pre_header
    _
  $region3: #{ealstm_forward.1} parent=0 // loop_header
    %s9 = sphi 0, %s13
    %p10 = scmp.ge.s32.totalorder %s9, 4
    %s16 = sphi 0, %s28
    %s17 = sphi 0, %s24
    %s18 = sphi 0, %s16
    %s19 = sphi 0, %s17
    %s20 = sphi 0, %s18
    %s21 = sphi 0, %s19
    %s33 = sphi 0, %s35
    %s36 = sphi 0, %s33
    %s37 = sphi 0, %s36
    %s53 = sphi 0, %s37
    %s59 = sphi 0, %s61
    %s62 = sphi 0, %s59
    %s63 = sphi 0, %s62
    %s79 = sphi 0, %s63
    %s83 = sphi 0, %s83
    %s85 = sphi 0, %s83
    %s86 = sphi 0, %s85
    %s100 = sphi 0, %s86
    %s108 = sphi 0, %s110
    %s111 = sphi 0, %s108
    %s112 = sphi 0, %s111
    %s128 = sphi 0, %s112
  $region4: #{ealstm_forward.1} parent=0 // loop_header_branch
    %12 = sbr.rel (%p10) target = $region8
  $region5: #{ealstm_forward.1} parent=0 // loop_body
    %s14 = ssub.s32 %s9, 1
    %s15 = ssub.s32 %s9, 2
    %s22 = sadd.s32 1, %s17
    %p23 = scmp.ge.s32.totalorder %s22, 2
    %s24 = scalar_select %p23, 0, %s22
    %s25 = sadd.s32 1, %s16
    %s26 = scalar_select %p23, %s25, %s16
    %p27 = scmp.ge.s32.totalorder %s26, 1
    %s28 = scalar_select %p27, 0, %s26
    %s29 = ssub.s32 %s17, %s24
    %s30 = ssub.s32 %s16, %s28
    %s31 = sor.u32 %s29, %s30
    %p32 = scmp.eq.s32.totalorder %s31, 0
    %s34 = sadd.s32 %s33, 1
    %s35 = scalar_select %p32, %s33, %s34
    %p38 = pneg %p32
    %p39 = scmp.eq.s32.totalorder %s9, 1
    %p40 = por %p38, %p39
    %p41 = scmp.ne.s32.totalorder %s33, %s36
    %p42 = scmp.eq.s32.totalorder %s9, 0
    %p43 = por %p41, %p42
    %p44 = scmp.ne.s32.totalorder %s33, %s36
    %p45 = scmp.eq.s32.totalorder %s14, 1
    %p46 = por %p44, %p45
    %p47 = scmp.ne.s32.totalorder %s36, %s37
    %p48 = scmp.eq.s32.totalorder %s14, 0
    %p49 = por %p47, %p48
    %p50 = scmp.ne.s32.totalorder %s36, %s37
    %p51 = scmp.eq.s32.totalorder %s15, 1
    %p52 = por %p50, %p51
    %p54 = scmp.ne.s32.totalorder %s37, %s53
    %p55 = scmp.eq.s32.totalorder %s15, 0
    %p56 = por %p54, %p55
    %s57 = ssub.s32 %s16, %s28
    %p58 = scmp.eq.s32.totalorder %s57, 0
    %s60 = sadd.s32 %s59, 1
    %s61 = scalar_select %p58, %s59, %s60
    %p64 = pneg %p58
    %p65 = scmp.eq.s32.totalorder %s9, 1
    %p66 = por %p64, %p65
    %p67 = scmp.ne.s32.totalorder %s59, %s62
    %p68 = scmp.eq.s32.totalorder %s9, 0
    %p69 = por %p67, %p68
    %p70 = scmp.ne.s32.totalorder %s59, %s62
    %p71 = scmp.eq.s32.totalorder %s14, 1
    %p72 = por %p70, %p71
    %p73 = scmp.ne.s32.totalorder %s62, %s63
    %p74 = scmp.eq.s32.totalorder %s14, 0
    %p75 = por %p73, %p74
    %p76 = scmp.ne.s32.totalorder %s62, %s63
    %p77 = scmp.eq.s32.totalorder %s15, 1
    %p78 = por %p76, %p77
    %p80 = scmp.ne.s32.totalorder %s63, %s79
    %p81 = scmp.eq.s32.totalorder %s15, 0
    %p82 = por %p80, %p81
    %s84 = sadd.s32 %s83, 1
    %p87 = scmp.eq.s32.totalorder %s9, 1
    %p88 = scmp.ne.s32.totalorder %s83, %s85
    %p89 = scmp.eq.s32.totalorder %s9, 0
    %p90 = por %p88, %p89
    %p91 = scmp.ne.s32.totalorder %s83, %s85
    %p92 = scmp.eq.s32.totalorder %s14, 1
    %p93 = por %p91, %p92
    %p94 = scmp.ne.s32.totalorder %s85, %s86
    %p95 = scmp.eq.s32.totalorder %s14, 0
    %p96 = por %p94, %p95
    %p97 = scmp.ne.s32.totalorder %s85, %s86
    %p98 = scmp.eq.s32.totalorder %s15, 1
    %p99 = por %p97, %p98
    %p101 = scmp.ne.s32.totalorder %s86, %s100
    %p102 = scmp.eq.s32.totalorder %s15, 0
    %p103 = por %p101, %p102
    %s104 = ssub.s32 %s17, %s24
    %s105 = ssub.s32 %s16, %s28
    %s106 = sor.u32 %s104, %s105
    %p107 = scmp.eq.s32.totalorder %s106, 0
    %s109 = sadd.s32 %s108, 1
    %s110 = scalar_select %p107, %s108, %s109
    %p113 = pneg %p107
    %p114 = scmp.eq.s32.totalorder %s9, 1
    %p115 = por %p113, %p114
    %p116 = scmp.ne.s32.totalorder %s108, %s111
    %p117 = scmp.eq.s32.totalorder %s9, 0
    %p118 = por %p116, %p117
    %p119 = scmp.ne.s32.totalorder %s108, %s111
    %p120 = scmp.eq.s32.totalorder %s14, 1
    %p121 = por %p119, %p120
    %p122 = scmp.ne.s32.totalorder %s111, %s112
    %p123 = scmp.eq.s32.totalorder %s14, 0
    %p124 = por %p122, %p123
    %p125 = scmp.ne.s32.totalorder %s111, %s112
    %p126 = scmp.eq.s32.totalorder %s15, 1
    %p127 = por %p125, %p126
    %p129 = scmp.ne.s32.totalorder %s112, %s128
    %p130 = scmp.eq.s32.totalorder %s15, 0
    %p131 = por %p129, %p130
    %p132 = scmp.le.s32.totalorder 1, %s9
    %p133 = scmp.lt.s32.totalorder %s9, 3
    %p134 = pnand %p132, %p133
    %p135 = pneg %p134
    // Predicated region
    $region9: #{ealstm_forward.1} parent=5 // pred_check
      _
    $region10: #{ealstm_forward.1} parent=5 // pred_check_branch
      %137 = sbr.rel (%p134) target = $region12
    $region11: #{ealstm_forward.1} parent=5 // pred_region
      %s138 = ssub.s32 %s9, 1
      // Predicated region
      $region13: #{ealstm_forward.1} parent=11 // pred_check
        %p139 = pneg %p75
      $region14: #{ealstm_forward.1} parent=11 // pred_check_branch
        %141 = sbr.rel (%p139) target = $region16
      $region15: #{ealstm_forward.1} parent=11 // pred_region
        %p142 = scmp.lt.s32.totalorder %s18, 0
        %s143 = scalar_select %p142, %s18, 0
        %s144 = smul.addr %s143, 8
        %s145 = scalar_lea.vmem %s1, %s144
      $region16: #{ealstm_forward.1} parent=11 // pred_fallthru
        _
      // Predicated region
      $region17: #{ealstm_forward.1} parent=11 // pred_check
        %p146 = pneg %p96
      $region18: #{ealstm_forward.1} parent=11 // pred_check_branch
        %148 = sbr.rel (%p146) target = $region20
      $region19: #{ealstm_forward.1} parent=11 // pred_region
        _
      $region20: #{ealstm_forward.1} parent=11 // pred_fallthru
        _
    $region12: #{ealstm_forward.1} parent=5 // pred_fallthru
      _
    %p149 = scmp.lt.s32.totalorder %s9, 2
    // Predicated region
    $region21: #{ealstm_forward.1} parent=5 // pred_check
      %p150 = pneg %p149
    $region22: #{ealstm_forward.1} parent=5 // pred_check_branch
      %152 = sbr.rel (%p150) target = $region24
    $region23: #{ealstm_forward.1} parent=5 // pred_region
      // Predicated region
      $region25: #{ealstm_forward.1} parent=23 // pred_check
        %p153 = pneg %p43
      $region26: #{ealstm_forward.1} parent=23 // pred_check_branch
        %155 = sbr.rel (%p153) target = $region28
      $region27: #{ealstm_forward.1} parent=23 // pred_region
        %s156 = smul.u32 8, %s17
        %p157 = scmp.lt.s32.totalorder %s156, 15
        %s158 = scalar_select %p157, %s156, 15
        %p159 = scmp.lt.s32.totalorder %s16, 0
        %s160 = scalar_select %p159, %s16, 0
        %s161 = sadd.s32 %s160, %s158
        %s162 = smul.addr %s161, 8
        %s163 = scalar_lea.vmem %s0, %s162
        %s164 = smul.u32 8, %s17
      $region28: #{ealstm_forward.1} parent=23 // pred_fallthru
        _
    $region24: #{ealstm_forward.1} parent=5 // pred_fallthru
      _
    %p165 = scmp.le.s32.totalorder 1, %s9
    %p166 = scmp.lt.s32.totalorder %s9, 3
    %p167 = pnand %p165, %p166
    %p168 = pneg %p167
    // Predicated region
    $region29: #{ealstm_forward.1} parent=5 // pred_check
      _
    $region30: #{ealstm_forward.1} parent=5 // pred_check_branch
      %170 = sbr.rel (%p167) target = $region32
    $region31: #{ealstm_forward.1} parent=5 // pred_region
      %s171 = ssub.s32 %s9, 1
      %s172 = smul.u32 8, %s19
      %p173 = scmp.lt.s32.totalorder %s172, 15
      %s174 = scalar_select %p173, %s172, 15
      %p175 = scmp.lt.s32.totalorder %s18, 0
      %s176 = scalar_select %p175, %s18, 0
      %s177 = sadd.s32 %s176, %s174
      %s178 = smul.addr %s177, 8
      %s179 = scalar_lea.vmem %s0, %s178
      %p180 = pneg %p49
      %p181 = pneg %p46
      %p182 = scmp.lt.s32.totalorder %s18, 0
      %s183 = scalar_select %p182, %s18, 0
      %s184 = smul.addr %s183, 8
      %s185 = scalar_lea.vmem %s1, %s184
      %p186 = pneg %p75
      %p187 = pneg %p72
      %p188 = pneg %p96
      %p189 = pneg %p93
      %p190 = pneg %p124
      %p191 = pneg %p121
      %s192 = smul.u32 8, %s19
      %p193 = scmp.lt.s32.totalorder %s192, 15
      %s194 = scalar_select %p193, %s192, 15
      %p195 = scmp.lt.s32.totalorder %s18, 0
      %s196 = scalar_select %p195, %s18, 0
      %s197 = sadd.s32 %s196, %s194
      %s198 = smul.addr %s197, 8
      %s199 = scalar_lea.vmem %s3, %s198
      %s200 = smul.u32 8, %s19
      %p201 = scmp.lt.s32.totalorder %s200, 15
      %s202 = scalar_select %p201, %s200, 15
      %p203 = scmp.lt.s32.totalorder %s18, 0
      %s204 = scalar_select %p203, %s18, 0
      %s205 = sadd.s32 %s204, %s202
      %s206 = smul.addr %s205, 8
      %s207 = scalar_lea.vmem %s0, %s206
      %s208 = smul.u32 8, %s19
      %p209 = scmp.lt.s32.totalorder %s18, 0
      %s210 = scalar_select %p209, %s18, 0
      %s211 = smul.addr %s210, 8
      %s212 = scalar_lea.vmem %s1, %s211
      %s213 = smul.u32 8, %s19
      %p214 = scmp.lt.s32.totalorder %s213, 15
      %s215 = scalar_select %p214, %s213, 15
      %p216 = scmp.lt.s32.totalorder %s18, 0
      %s217 = scalar_select %p216, %s18, 0
      %s218 = sadd.s32 %s217, %s215
      %s219 = smul.addr %s218, 8
      %s220 = scalar_lea.vmem %s3, %s219
      %s221 = smul.u32 8, %s19
      %p222 = scmp.eq.s32.totalorder %s19, 0
      // Predicated region
      $region33: #{ealstm_forward.1} parent=31 // pred_check
        %p223 = pneg %p222
      $region34: #{ealstm_forward.1} parent=31 // pred_check_branch
        %225 = sbr.rel (%p223) target = $region36
      $region35: #{ealstm_forward.1} parent=31 // pred_region
        %vm226 = vcmask 261120
        %227 = vst.msk [vmem:[#allocation2] sm:$0xff] %vm226, 0.0
        %228 = vst.msk [vmem:[#allocation3] sm:$0xff] %vm226, 0.0
      $region36: #{ealstm_forward.1} parent=31 // pred_fallthru
        _
      %v229 = vld [vmem:[%s212] sm:$0xff]
      %v230 = vld [vmem:[%s2] sm:$0xff]
      %v231 = vld [vmem:[%s2 + $0x8] sm:$0xff]
      %v232 = vld [vmem:[%s2 + $0x10] sm:$0xff]
      %v233 = vld [vmem:[%s2 + $0x18] sm:$0xff]
      %v234 = vld [vmem:[#allocation2] sm:$0xff]
      %v235 = vld [vmem:[#allocation3] sm:$0xff]
      %v236 = vld [vmem:[%s207] sm:$0xff]
      %vm237 = vcmask 261120
      %v239 = vsel %vm237, %v234, 0
      %241 = vmatprep.subr.mxu0 0.0
      %242 = vmatpush1.msra.mxu0 0.0
      %243 = vmatprep.subr.mxu0 0.0
      %244 = vmatpush1.msra.mxu0 0.0
      %245 = vmatprep.subr.mxu0 0.0
      %246 = vmatpush1.msra.mxu0 0.0
      %247 = vmatprep.subr.mxu0 0.0
      %248 = vmatpush1.msra.mxu0 0.0
      %249 = vmatprep.subr.mxu0 0.0
      %250 = vmatpush1.msra.mxu0 0.0
      %251 = vmatprep.subr.mxu0 0.0
      %252 = vmatpush1.msra.mxu0 0.0
      %253 = vmatprep.subr.mxu0 0.0
      %254 = vmatpush1.msra.mxu0 0.0
      %255 = vmatprep.subr.mxu0 0.0
      %256 = vmatpush1.msra.mxu0 0.0
      %257 = vmatprep.subr.mxu0 0.0
      %258 = vmatpush1.msra.mxu0 0.0
      %259 = vmatprep.subr.mxu0 0.0
      %260 = vmatpush1.msra.mxu0 0.0
      %261 = vmatprep.subr.mxu0 0.0
      %262 = vmatpush1.msra.mxu0 0.0
      %263 = vmatprep.subr.mxu0 0.0
      %264 = vmatpush1.msra.mxu0 0.0
      %265 = vmatprep.subr.mxu0 0.0
      %266 = vmatpush1.msra.mxu0 %v233
      %267 = vmatprep.subr.mxu0 0.0
      %268 = vmatpush1.msra.mxu0 %v232
      %269 = vmatprep.subr.mxu0 0.0
      %270 = vmatpush1.msra.mxu0 %v231
      %271 = vmatprep.subr.mxu0 0.0
      %272 = vmatpush1.msra.mxu0 %v230
      %273 = vmatprep.subr.mxu0 0.0
      %274 = vmatpush2.msra.mxu0 0.0
      %275 = vmatprep.subr.mxu0 0.0
      %276 = vmatpush2.msra.mxu0 0.0
      %277 = vmatprep.subr.mxu0 0.0
      %278 = vmatpush2.msra.mxu0 0.0
      %279 = vmatprep.subr.mxu0 0.0
      %280 = vmatpush2.msra.mxu0 0.0
      %281 = vmatprep.subr.mxu0 0.0
      %282 = vmatpush2.msra.mxu0 0.0
      %283 = vmatprep.subr.mxu0 0.0
      %284 = vmatpush2.msra.mxu0 0.0
      %285 = vmatprep.subr.mxu0 0.0
      %286 = vmatpush2.msra.mxu0 0.0
      %287 = vmatprep.subr.mxu0 0.0
      %288 = vmatpush2.msra.mxu0 0.0
      %289 = vmatprep.subr.mxu0 0.0
      %290 = vmatpush2.msra.mxu0 0.0
      %291 = vmatprep.subr.mxu0 0.0
      %292 = vmatpush2.msra.mxu0 0.0
      %293 = vmatprep.subr.mxu0 0.0
      %294 = vmatpush2.msra.mxu0 0.0
      %295 = vmatprep.subr.mxu0 0.0
      %296 = vmatpush2.msra.mxu0 0.0
      %297 = vmatprep.subr.mxu0 0.0
      %298 = vmatpush2.msra.mxu0 0.0
      %299 = vmatprep.subr.mxu0 0.0
      %300 = vmatpush2.msra.mxu0 0.0
      %301 = vmatprep.subr.mxu0 0.0
      %302 = vmatpush2.msra.mxu0 0.0
      %303 = vmatprep.subr.mxu0 0.0
      %304 = vmatpush2.msra.mxu0 0.0
      %305 = vmatprep.mubr.f32.mxu0 0.0
      %306 = vmatmul.mubr.f32.gmra.mxu0 %v239
      %v307 = vpop.f32.mrf.mxu0
      %v308 = vadd.f32 0.0, %v307
      %v309 = vpop.f32.mrf.mxu0
      %310 = vdwg.mxu0
      %v311 = vadd.f32 %v236, %v308
      %v312 = vxor.u32 %v311, 2147483648
      %v313 = vmul.f32 %v312, 1.442695
      %v314 = vpow.pop %v313
      %v315 = vadd.f32 %v314, 1.0
      %v316 = vrcp.pop %v315
      %v317 = vmul.f32 1.0, %v316
      %v318 = vtanh.pop %v311
      %v319 = vmul.f32 %v317, %v235
      %321 = vrot.lane.b32.xlu0 %v318, 96
      %v322 = vpop.permute.xlu0 %321
      %v324 = vmul.f32 %v229, %v322
      %v325 = vadd.f32 %v319, %v324
      %v326 = vtanh.pop %v325
      %328 = vrot.lane.b32.xlu0 %v326, 64
      %v329 = vpop.permute.xlu0 %328
      %v331 = vmul.f32 %v317, %v329
      %333 = vrot.lane.b32.xlu0 %v331, 64
      %v334 = vpop.permute.xlu0 %333
      %337 = vrot.lane.b32.xlu0 %v325, 32
      %v338 = vpop.permute.xlu0 %337
      %v340 = vsel %vm237, %v334, %v338
      %vm341 = vcmask 523264
      %342 = vst.msk [vmem:[%s220] sm:$0xff] %vm341, %v340
      %s343 = scalar_lea.vmem %s207, 8
      %v344 = vld [vmem:[%s343] sm:$0xff]
      %v345 = vsel %vm237, %v334, 0
      %347 = vmatprep.subr.mxu0 0.0
      %348 = vmatpush1.msra.mxu0 0.0
      %349 = vmatprep.subr.mxu0 0.0
      %350 = vmatpush1.msra.mxu0 0.0
      %351 = vmatprep.subr.mxu0 0.0
      %352 = vmatpush1.msra.mxu0 0.0
      %353 = vmatprep.subr.mxu0 0.0
      %354 = vmatpush1.msra.mxu0 0.0
      %355 = vmatprep.subr.mxu0 0.0
      %356 = vmatpush1.msra.mxu0 0.0
      %357 = vmatprep.subr.mxu0 0.0
      %358 = vmatpush1.msra.mxu0 0.0
      %359 = vmatprep.subr.mxu0 0.0
      %360 = vmatpush1.msra.mxu0 0.0
      %361 = vmatprep.subr.mxu0 0.0
      %362 = vmatpush1.msra.mxu0 0.0
      %363 = vmatprep.subr.mxu0 0.0
      %364 = vmatpush1.msra.mxu0 0.0
      %365 = vmatprep.subr.mxu0 0.0
      %366 = vmatpush1.msra.mxu0 0.0
      %367 = vmatprep.subr.mxu0 0.0
      %368 = vmatpush1.msra.mxu0 0.0
      %369 = vmatprep.subr.mxu0 0.0
      %370 = vmatpush1.msra.mxu0 0.0
      %371 = vmatprep.subr.mxu0 0.0
      %372 = vmatpush1.msra.mxu0 %v233
      %373 = vmatprep.subr.mxu0 0.0
      %374 = vmatpush1.msra.mxu0 %v232
      %375 = vmatprep.subr.mxu0 0.0
      %376 = vmatpush1.msra.mxu0 %v231
      %377 = vmatprep.subr.mxu0 0.0
      %378 = vmatpush1.msra.mxu0 %v230
      %379 = vmatprep.subr.mxu0 0.0
      %380 = vmatpush2.msra.mxu0 0.0
      %381 = vmatprep.subr.mxu0 0.0
      %382 = vmatpush2.msra.mxu0 0.0
      %383 = vmatprep.subr.mxu0 0.0
      %384 = vmatpush2.msra.mxu0 0.0
      %385 = vmatprep.subr.mxu0 0.0
      %386 = vmatpush2.msra.mxu0 0.0
      %387 = vmatprep.subr.mxu0 0.0
      %388 = vmatpush2.msra.mxu0 0.0
      %389 = vmatprep.subr.mxu0 0.0
      %390 = vmatpush2.msra.mxu0 0.0
      %391 = vmatprep.subr.mxu0 0.0
      %392 = vmatpush2.msra.mxu0 0.0
      %393 = vmatprep.subr.mxu0 0.0
      %394 = vmatpush2.msra.mxu0 0.0
      %395 = vmatprep.subr.mxu0 0.0
      %396 = vmatpush2.msra.mxu0 0.0
      %397 = vmatprep.subr.mxu0 0.0
      %398 = vmatpush2.msra.mxu0 0.0
      %399 = vmatprep.subr.mxu0 0.0
      %400 = vmatpush2.msra.mxu0 0.0
      %401 = vmatprep.subr.mxu0 0.0
      %402 = vmatpush2.msra.mxu0 0.0
      %403 = vmatprep.subr.mxu0 0.0
      %404 = vmatpush2.msra.mxu0 0.0
      %405 = vmatprep.subr.mxu0 0.0
      %406 = vmatpush2.msra.mxu0 0.0
      %407 = vmatprep.subr.mxu0 0.0
      %408 = vmatpush2.msra.mxu0 0.0
      %409 = vmatprep.subr.mxu0 0.0
      %410 = vmatpush2.msra.mxu0 0.0
      %411 = vmatprep.mubr.f32.mxu0 0.0
      %412 = vmatmul.mubr.f32.gmra.mxu0 %v345
      %v413 = vpop.f32.mrf.mxu0
      %v414 = vadd.f32 0.0, %v413
      %v415 = vpop.f32.mrf.mxu0
      %416 = vdwg.mxu0
      %v417 = vadd.f32 %v344, %v414
      %v418 = vxor.u32 %v417, 2147483648
      %v419 = vmul.f32 %v418, 1.442695
      %v420 = vpow.pop %v419
      %v421 = vadd.f32 %v420, 1.0
      %v422 = vrcp.pop %v421
      %v423 = vmul.f32 1.0, %v422
      %v424 = vtanh.pop %v417
      %v425 = vmul.f32 %v423, %v325
      %427 = vrot.lane.b32.xlu0 %v424, 96
      %v428 = vpop.permute.xlu0 %427
      %v430 = vmul.f32 %v229, %v428
      %v431 = vadd.f32 %v425, %v430
      %v432 = vtanh.pop %v431
      %434 = vrot.lane.b32.xlu0 %v432, 64
      %v435 = vpop.permute.xlu0 %434
      %v437 = vmul.f32 %v423, %v435
      %439 = vrot.lane.b32.xlu0 %v437, 64
      %v440 = vpop.permute.xlu0 %439
      %443 = vrot.lane.b32.xlu0 %v431, 32
      %v444 = vpop.permute.xlu0 %443
      %v446 = vsel %vm237, %v440, %v444
      %s447 = scalar_lea.vmem %s220, 8
      %448 = vst.msk [vmem:[%s447] sm:$0xff] %vm341, %v446
      %s449 = scalar_lea.vmem %s207, 16
      %v450 = vld [vmem:[%s449] sm:$0xff]
      %v451 = vsel %vm237, %v440, 0
      %453 = vmatprep.subr.mxu0 0.0
      %454 = vmatpush1.msra.mxu0 0.0
      %455 = vmatprep.subr.mxu0 0.0
      %456 = vmatpush1.msra.mxu0 0.0
      %457 = vmatprep.subr.mxu0 0.0
      %458 = vmatpush1.msra.mxu0 0.0
      %459 = vmatprep.subr.mxu0 0.0
      %460 = vmatpush1.msra.mxu0 0.0
      %461 = vmatprep.subr.mxu0 0.0
      %462 = vmatpush1.msra.mxu0 0.0
      %463 = vmatprep.subr.mxu0 0.0
      %464 = vmatpush1.msra.mxu0 0.0
      %465 = vmatprep.subr.mxu0 0.0
      %466 = vmatpush1.msra.mxu0 0.0
      %467 = vmatprep.subr.mxu0 0.0
      %468 = vmatpush1.msra.mxu0 0.0
      %469 = vmatprep.subr.mxu0 0.0
      %470 = vmatpush1.msra.mxu0 0.0
      %471 = vmatprep.subr.mxu0 0.0
      %472 = vmatpush1.msra.mxu0 0.0
      %473 = vmatprep.subr.mxu0 0.0
      %474 = vmatpush1.msra.mxu0 0.0
      %475 = vmatprep.subr.mxu0 0.0
      %476 = vmatpush1.msra.mxu0 0.0
      %477 = vmatprep.subr.mxu0 0.0
      %478 = vmatpush1.msra.mxu0 %v233
      %479 = vmatprep.subr.mxu0 0.0
      %480 = vmatpush1.msra.mxu0 %v232
      %481 = vmatprep.subr.mxu0 0.0
      %482 = vmatpush1.msra.mxu0 %v231
      %483 = vmatprep.subr.mxu0 0.0
      %484 = vmatpush1.msra.mxu0 %v230
      %485 = vmatprep.subr.mxu0 0.0
      %486 = vmatpush2.msra.mxu0 0.0
      %487 = vmatprep.subr.mxu0 0.0
      %488 = vmatpush2.msra.mxu0 0.0
      %489 = vmatprep.subr.mxu0 0.0
      %490 = vmatpush2.msra.mxu0 0.0
      %491 = vmatprep.subr.mxu0 0.0
      %492 = vmatpush2.msra.mxu0 0.0
      %493 = vmatprep.subr.mxu0 0.0
      %494 = vmatpush2.msra.mxu0 0.0
      %495 = vmatprep.subr.mxu0 0.0
      %496 = vmatpush2.msra.mxu0 0.0
      %497 = vmatprep.subr.mxu0 0.0
      %498 = vmatpush2.msra.mxu0 0.0
      %499 = vmatprep.subr.mxu0 0.0
      %500 = vmatpush2.msra.mxu0 0.0
      %501 = vmatprep.subr.mxu0 0.0
      %502 = vmatpush2.msra.mxu0 0.0
      %503 = vmatprep.subr.mxu0 0.0
      %504 = vmatpush2.msra.mxu0 0.0
      %505 = vmatprep.subr.mxu0 0.0
      %506 = vmatpush2.msra.mxu0 0.0
      %507 = vmatprep.subr.mxu0 0.0
      %508 = vmatpush2.msra.mxu0 0.0
      %509 = vmatprep.subr.mxu0 0.0
      %510 = vmatpush2.msra.mxu0 0.0
      %511 = vmatprep.subr.mxu0 0.0
      %512 = vmatpush2.msra.mxu0 0.0
      %513 = vmatprep.subr.mxu0 0.0
      %514 = vmatpush2.msra.mxu0 0.0
      %515 = vmatprep.subr.mxu0 0.0
      %516 = vmatpush2.msra.mxu0 0.0
      %517 = vmatprep.mubr.f32.mxu0 0.0
      %518 = vmatmul.mubr.f32.gmra.mxu0 %v451
      %v519 = vpop.f32.mrf.mxu0
      %v520 = vadd.f32 0.0, %v519
      %v521 = vpop.f32.mrf.mxu0
      %522 = vdwg.mxu0
      %v523 = vadd.f32 %v450, %v520
      %v524 = vxor.u32 %v523, 2147483648
      %v525 = vmul.f32 %v524, 1.442695
      %v526 = vpow.pop %v525
      %v527 = vadd.f32 %v526, 1.0
      %v528 = vrcp.pop %v527
      %v529 = vmul.f32 1.0, %v528
      %v530 = vtanh.pop %v523
      %v531 = vmul.f32 %v529, %v431
      %533 = vrot.lane.b32.xlu0 %v530, 96
      %v534 = vpop.permute.xlu0 %533
      %v536 = vmul.f32 %v229, %v534
      %v537 = vadd.f32 %v531, %v536
      %v538 = vtanh.pop %v537
      %540 = vrot.lane.b32.xlu0 %v538, 64
      %v541 = vpop.permute.xlu0 %540
      %v543 = vmul.f32 %v529, %v541
      %545 = vrot.lane.b32.xlu0 %v543, 64
      %v546 = vpop.permute.xlu0 %545
      %549 = vrot.lane.b32.xlu0 %v537, 32
      %v550 = vpop.permute.xlu0 %549
      %v552 = vsel %vm237, %v546, %v550
      %s553 = scalar_lea.vmem %s220, 16
      %554 = vst.msk [vmem:[%s553] sm:$0xff] %vm341, %v552
      %s555 = scalar_lea.vmem %s207, 24
      %v556 = vld [vmem:[%s555] sm:$0xff]
      %v557 = vsel %vm237, %v546, 0
      %559 = vmatprep.subr.mxu0 0.0
      %560 = vmatpush1.msra.mxu0 0.0
      %561 = vmatprep.subr.mxu0 0.0
      %562 = vmatpush1.msra.mxu0 0.0
      %563 = vmatprep.subr.mxu0 0.0
      %564 = vmatpush1.msra.mxu0 0.0
      %565 = vmatprep.subr.mxu0 0.0
      %566 = vmatpush1.msra.mxu0 0.0
      %567 = vmatprep.subr.mxu0 0.0
      %568 = vmatpush1.msra.mxu0 0.0
      %569 = vmatprep.subr.mxu0 0.0
      %570 = vmatpush1.msra.mxu0 0.0
      %571 = vmatprep.subr.mxu0 0.0
      %572 = vmatpush1.msra.mxu0 0.0
      %573 = vmatprep.subr.mxu0 0.0
      %574 = vmatpush1.msra.mxu0 0.0
      %575 = vmatprep.subr.mxu0 0.0
      %576 = vmatpush1.msra.mxu0 0.0
      %577 = vmatprep.subr.mxu0 0.0
      %578 = vmatpush1.msra.mxu0 0.0
      %579 = vmatprep.subr.mxu0 0.0
      %580 = vmatpush1.msra.mxu0 0.0
      %581 = vmatprep.subr.mxu0 0.0
      %582 = vmatpush1.msra.mxu0 0.0
      %583 = vmatprep.subr.mxu0 0.0
      %584 = vmatpush1.msra.mxu0 %v233
      %585 = vmatprep.subr.mxu0 0.0
      %586 = vmatpush1.msra.mxu0 %v232
      %587 = vmatprep.subr.mxu0 0.0
      %588 = vmatpush1.msra.mxu0 %v231
      %589 = vmatprep.subr.mxu0 0.0
      %590 = vmatpush1.msra.mxu0 %v230
      %591 = vmatprep.subr.mxu0 0.0
      %592 = vmatpush2.msra.mxu0 0.0
      %593 = vmatprep.subr.mxu0 0.0
      %594 = vmatpush2.msra.mxu0 0.0
      %595 = vmatprep.subr.mxu0 0.0
      %596 = vmatpush2.msra.mxu0 0.0
      %597 = vmatprep.subr.mxu0 0.0
      %598 = vmatpush2.msra.mxu0 0.0
      %599 = vmatprep.subr.mxu0 0.0
      %600 = vmatpush2.msra.mxu0 0.0
      %601 = vmatprep.subr.mxu0 0.0
      %602 = vmatpush2.msra.mxu0 0.0
      %603 = vmatprep.subr.mxu0 0.0
      %604 = vmatpush2.msra.mxu0 0.0
      %605 = vmatprep.subr.mxu0 0.0
      %606 = vmatpush2.msra.mxu0 0.0
      %607 = vmatprep.subr.mxu0 0.0
      %608 = vmatpush2.msra.mxu0 0.0
      %609 = vmatprep.subr.mxu0 0.0
      %610 = vmatpush2.msra.mxu0 0.0
      %611 = vmatprep.subr.mxu0 0.0
      %612 = vmatpush2.msra.mxu0 0.0
      %613 = vmatprep.subr.mxu0 0.0
      %614 = vmatpush2.msra.mxu0 0.0
      %615 = vmatprep.subr.mxu0 0.0
      %616 = vmatpush2.msra.mxu0 0.0
      %617 = vmatprep.subr.mxu0 0.0
      %618 = vmatpush2.msra.mxu0 0.0
      %619 = vmatprep.subr.mxu0 0.0
      %620 = vmatpush2.msra.mxu0 0.0
      %621 = vmatprep.subr.mxu0 0.0
      %622 = vmatpush2.msra.mxu0 0.0
      %623 = vmatprep.mubr.f32.mxu0 0.0
      %624 = vmatmul.mubr.f32.gmra.mxu0 %v557
      %v625 = vpop.f32.mrf.mxu0
      %v626 = vadd.f32 0.0, %v625
      %v627 = vpop.f32.mrf.mxu0
      %628 = vdwg.mxu0
      %v629 = vadd.f32 %v556, %v626
      %v630 = vxor.u32 %v629, 2147483648
      %v631 = vmul.f32 %v630, 1.442695
      %v632 = vpow.pop %v631
      %v633 = vadd.f32 %v632, 1.0
      %v634 = vrcp.pop %v633
      %v635 = vmul.f32 1.0, %v634
      %v636 = vtanh.pop %v629
      %v637 = vmul.f32 %v635, %v537
      %639 = vrot.lane.b32.xlu0 %v636, 96
      %v640 = vpop.permute.xlu0 %639
      %v642 = vmul.f32 %v229, %v640
      %v643 = vadd.f32 %v637, %v642
      %v644 = vtanh.pop %v643
      %646 = vrot.lane.b32.xlu0 %v644, 64
      %v647 = vpop.permute.xlu0 %646
      %v649 = vmul.f32 %v635, %v647
      %651 = vrot.lane.b32.xlu0 %v649, 64
      %v652 = vpop.permute.xlu0 %651
      %655 = vrot.lane.b32.xlu0 %v643, 32
      %v656 = vpop.permute.xlu0 %655
      %v658 = vsel %vm237, %v652, %v656
      %s659 = scalar_lea.vmem %s220, 24
      %660 = vst.msk [vmem:[%s659] sm:$0xff] %vm341, %v658
      %s661 = scalar_lea.vmem %s207, 32
      %v662 = vld [vmem:[%s661] sm:$0xff]
      %v663 = vsel %vm237, %v652, 0
      %665 = vmatprep.subr.mxu0 0.0
      %666 = vmatpush1.msra.mxu0 0.0
      %667 = vmatprep.subr.mxu0 0.0
      %668 = vmatpush1.msra.mxu0 0.0
      %669 = vmatprep.subr.mxu0 0.0
      %670 = vmatpush1.msra.mxu0 0.0
      %671 = vmatprep.subr.mxu0 0.0
      %672 = vmatpush1.msra.mxu0 0.0
      %673 = vmatprep.subr.mxu0 0.0
      %674 = vmatpush1.msra.mxu0 0.0
      %675 = vmatprep.subr.mxu0 0.0
      %676 = vmatpush1.msra.mxu0 0.0
      %677 = vmatprep.subr.mxu0 0.0
      %678 = vmatpush1.msra.mxu0 0.0
      %679 = vmatprep.subr.mxu0 0.0
      %680 = vmatpush1.msra.mxu0 0.0
      %681 = vmatprep.subr.mxu0 0.0
      %682 = vmatpush1.msra.mxu0 0.0
      %683 = vmatprep.subr.mxu0 0.0
      %684 = vmatpush1.msra.mxu0 0.0
      %685 = vmatprep.subr.mxu0 0.0
      %686 = vmatpush1.msra.mxu0 0.0
      %687 = vmatprep.subr.mxu0 0.0
      %688 = vmatpush1.msra.mxu0 0.0
      %689 = vmatprep.subr.mxu0 0.0
      %690 = vmatpush1.msra.mxu0 %v233
      %691 = vmatprep.subr.mxu0 0.0
      %692 = vmatpush1.msra.mxu0 %v232
      %693 = vmatprep.subr.mxu0 0.0
      %694 = vmatpush1.msra.mxu0 %v231
      %695 = vmatprep.subr.mxu0 0.0
      %696 = vmatpush1.msra.mxu0 %v230
      %697 = vmatprep.subr.mxu0 0.0
      %698 = vmatpush2.msra.mxu0 0.0
      %699 = vmatprep.subr.mxu0 0.0
      %700 = vmatpush2.msra.mxu0 0.0
      %701 = vmatprep.subr.mxu0 0.0
      %702 = vmatpush2.msra.mxu0 0.0
      %703 = vmatprep.subr.mxu0 0.0
      %704 = vmatpush2.msra.mxu0 0.0
      %705 = vmatprep.subr.mxu0 0.0
      %706 = vmatpush2.msra.mxu0 0.0
      %707 = vmatprep.subr.mxu0 0.0
      %708 = vmatpush2.msra.mxu0 0.0
      %709 = vmatprep.subr.mxu0 0.0
      %710 = vmatpush2.msra.mxu0 0.0
      %711 = vmatprep.subr.mxu0 0.0
      %712 = vmatpush2.msra.mxu0 0.0
      %713 = vmatprep.subr.mxu0 0.0
      %714 = vmatpush2.msra.mxu0 0.0
      %715 = vmatprep.subr.mxu0 0.0
      %716 = vmatpush2.msra.mxu0 0.0
      %717 = vmatprep.subr.mxu0 0.0
      %718 = vmatpush2.msra.mxu0 0.0
      %719 = vmatprep.subr.mxu0 0.0
      %720 = vmatpush2.msra.mxu0 0.0
      %721 = vmatprep.subr.mxu0 0.0
      %722 = vmatpush2.msra.mxu0 0.0
      %723 = vmatprep.subr.mxu0 0.0
      %724 = vmatpush2.msra.mxu0 0.0
      %725 = vmatprep.subr.mxu0 0.0
      %726 = vmatpush2.msra.mxu0 0.0
      %727 = vmatprep.subr.mxu0 0.0
      %728 = vmatpush2.msra.mxu0 0.0
      %729 = vmatprep.mubr.f32.mxu0 0.0
      %730 = vmatmul.mubr.f32.gmra.mxu0 %v663
      %v731 = vpop.f32.mrf.mxu0
      %v732 = vadd.f32 0.0, %v731
      %v733 = vpop.f32.mrf.mxu0
      %734 = vdwg.mxu0
      %v735 = vadd.f32 %v662, %v732
      %v736 = vxor.u32 %v735, 2147483648
      %v737 = vmul.f32 %v736, 1.442695
      %v738 = vpow.pop %v737
      %v739 = vadd.f32 %v738, 1.0
      %v740 = vrcp.pop %v739
      %v741 = vmul.f32 1.0, %v740
      %v742 = vtanh.pop %v735
      %v743 = vmul.f32 %v741, %v643
      %745 = vrot.lane.b32.xlu0 %v742, 96
      %v746 = vpop.permute.xlu0 %745
      %v748 = vmul.f32 %v229, %v746
      %v749 = vadd.f32 %v743, %v748
      %v750 = vtanh.pop %v749
      %752 = vrot.lane.b32.xlu0 %v750, 64
      %v753 = vpop.permute.xlu0 %752
      %v755 = vmul.f32 %v741, %v753
      %757 = vrot.lane.b32.xlu0 %v755, 64
      %v758 = vpop.permute.xlu0 %757
      %761 = vrot.lane.b32.xlu0 %v749, 32
      %v762 = vpop.permute.xlu0 %761
      %v764 = vsel %vm237, %v758, %v762
      %s765 = scalar_lea.vmem %s220, 32
      %766 = vst.msk [vmem:[%s765] sm:$0xff] %vm341, %v764
      %s767 = scalar_lea.vmem %s207, 40
      %v768 = vld [vmem:[%s767] sm:$0xff]
      %v769 = vsel %vm237, %v758, 0
      %771 = vmatprep.subr.mxu0 0.0
      %772 = vmatpush1.msra.mxu0 0.0
      %773 = vmatprep.subr.mxu0 0.0
      %774 = vmatpush1.msra.mxu0 0.0
      %775 = vmatprep.subr.mxu0 0.0
      %776 = vmatpush1.msra.mxu0 0.0
      %777 = vmatprep.subr.mxu0 0.0
      %778 = vmatpush1.msra.mxu0 0.0
      %779 = vmatprep.subr.mxu0 0.0
      %780 = vmatpush1.msra.mxu0 0.0
      %781 = vmatprep.subr.mxu0 0.0
      %782 = vmatpush1.msra.mxu0 0.0
      %783 = vmatprep.subr.mxu0 0.0
      %784 = vmatpush1.msra.mxu0 0.0
      %785 = vmatprep.subr.mxu0 0.0
      %786 = vmatpush1.msra.mxu0 0.0
      %787 = vmatprep.subr.mxu0 0.0
      %788 = vmatpush1.msra.mxu0 0.0
      %789 = vmatprep.subr.mxu0 0.0
      %790 = vmatpush1.msra.mxu0 0.0
      %791 = vmatprep.subr.mxu0 0.0
      %792 = vmatpush1.msra.mxu0 0.0
      %793 = vmatprep.subr.mxu0 0.0
      %794 = vmatpush1.msra.mxu0 0.0
      %795 = vmatprep.subr.mxu0 0.0
      %796 = vmatpush1.msra.mxu0 %v233
      %797 = vmatprep.subr.mxu0 0.0
      %798 = vmatpush1.msra.mxu0 %v232
      %799 = vmatprep.subr.mxu0 0.0
      %800 = vmatpush1.msra.mxu0 %v231
      %801 = vmatprep.subr.mxu0 0.0
      %802 = vmatpush1.msra.mxu0 %v230
      %803 = vmatprep.subr.mxu0 0.0
      %804 = vmatpush2.msra.mxu0 0.0
      %805 = vmatprep.subr.mxu0 0.0
      %806 = vmatpush2.msra.mxu0 0.0
      %807 = vmatprep.subr.mxu0 0.0
      %808 = vmatpush2.msra.mxu0 0.0
      %809 = vmatprep.subr.mxu0 0.0
      %810 = vmatpush2.msra.mxu0 0.0
      %811 = vmatprep.subr.mxu0 0.0
      %812 = vmatpush2.msra.mxu0 0.0
      %813 = vmatprep.subr.mxu0 0.0
      %814 = vmatpush2.msra.mxu0 0.0
      %815 = vmatprep.subr.mxu0 0.0
      %816 = vmatpush2.msra.mxu0 0.0
      %817 = vmatprep.subr.mxu0 0.0
      %818 = vmatpush2.msra.mxu0 0.0
      %819 = vmatprep.subr.mxu0 0.0
      %820 = vmatpush2.msra.mxu0 0.0
      %821 = vmatprep.subr.mxu0 0.0
      %822 = vmatpush2.msra.mxu0 0.0
      %823 = vmatprep.subr.mxu0 0.0
      %824 = vmatpush2.msra.mxu0 0.0
      %825 = vmatprep.subr.mxu0 0.0
      %826 = vmatpush2.msra.mxu0 0.0
      %827 = vmatprep.subr.mxu0 0.0
      %828 = vmatpush2.msra.mxu0 0.0
      %829 = vmatprep.subr.mxu0 0.0
      %830 = vmatpush2.msra.mxu0 0.0
      %831 = vmatprep.subr.mxu0 0.0
      %832 = vmatpush2.msra.mxu0 0.0
      %833 = vmatprep.subr.mxu0 0.0
      %834 = vmatpush2.msra.mxu0 0.0
      %835 = vmatprep.mubr.f32.mxu0 0.0
      %836 = vmatmul.mubr.f32.gmra.mxu0 %v769
      %v837 = vpop.f32.mrf.mxu0
      %v838 = vadd.f32 0.0, %v837
      %v839 = vpop.f32.mrf.mxu0
      %840 = vdwg.mxu0
      %v841 = vadd.f32 %v768, %v838
      %v842 = vxor.u32 %v841, 2147483648
      %v843 = vmul.f32 %v842, 1.442695
      %v844 = vpow.pop %v843
      %v845 = vadd.f32 %v844, 1.0
      %v846 = vrcp.pop %v845
      %v847 = vmul.f32 1.0, %v846
      %v848 = vtanh.pop %v841
      %v849 = vmul.f32 %v847, %v749
      %851 = vrot.lane.b32.xlu0 %v848, 96
      %v852 = vpop.permute.xlu0 %851
      %v854 = vmul.f32 %v229, %v852
      %v855 = vadd.f32 %v849, %v854
      %v856 = vtanh.pop %v855
      %858 = vrot.lane.b32.xlu0 %v856, 64
      %v859 = vpop.permute.xlu0 %858
      %v861 = vmul.f32 %v847, %v859
      %863 = vrot.lane.b32.xlu0 %v861, 64
      %v864 = vpop.permute.xlu0 %863
      %867 = vrot.lane.b32.xlu0 %v855, 32
      %v868 = vpop.permute.xlu0 %867
      %v870 = vsel %vm237, %v864, %v868
      %s871 = scalar_lea.vmem %s220, 40
      %872 = vst.msk [vmem:[%s871] sm:$0xff] %vm341, %v870
      %s873 = scalar_lea.vmem %s207, 48
      %v874 = vld [vmem:[%s873] sm:$0xff]
      %v875 = vsel %vm237, %v864, 0
      %877 = vmatprep.subr.mxu0 0.0
      %878 = vmatpush1.msra.mxu0 0.0
      %879 = vmatprep.subr.mxu0 0.0
      %880 = vmatpush1.msra.mxu0 0.0
      %881 = vmatprep.subr.mxu0 0.0
      %882 = vmatpush1.msra.mxu0 0.0
      %883 = vmatprep.subr.mxu0 0.0
      %884 = vmatpush1.msra.mxu0 0.0
      %885 = vmatprep.subr.mxu0 0.0
      %886 = vmatpush1.msra.mxu0 0.0
      %887 = vmatprep.subr.mxu0 0.0
      %888 = vmatpush1.msra.mxu0 0.0
      %889 = vmatprep.subr.mxu0 0.0
      %890 = vmatpush1.msra.mxu0 0.0
      %891 = vmatprep.subr.mxu0 0.0
      %892 = vmatpush1.msra.mxu0 0.0
      %893 = vmatprep.subr.mxu0 0.0
      %894 = vmatpush1.msra.mxu0 0.0
      %895 = vmatprep.subr.mxu0 0.0
      %896 = vmatpush1.msra.mxu0 0.0
      %897 = vmatprep.subr.mxu0 0.0
      %898 = vmatpush1.msra.mxu0 0.0
      %899 = vmatprep.subr.mxu0 0.0
      %900 = vmatpush1.msra.mxu0 0.0
      %901 = vmatprep.subr.mxu0 0.0
      %902 = vmatpush1.msra.mxu0 %v233
      %903 = vmatprep.subr.mxu0 0.0
      %904 = vmatpush1.msra.mxu0 %v232
      %905 = vmatprep.subr.mxu0 0.0
      %906 = vmatpush1.msra.mxu0 %v231
      %907 = vmatprep.subr.mxu0 0.0
      %908 = vmatpush1.msra.mxu0 %v230
      %909 = vmatprep.subr.mxu0 0.0
      %910 = vmatpush2.msra.mxu0 0.0
      %911 = vmatprep.subr.mxu0 0.0
      %912 = vmatpush2.msra.mxu0 0.0
      %913 = vmatprep.subr.mxu0 0.0
      %914 = vmatpush2.msra.mxu0 0.0
      %915 = vmatprep.subr.mxu0 0.0
      %916 = vmatpush2.msra.mxu0 0.0
      %917 = vmatprep.subr.mxu0 0.0
      %918 = vmatpush2.msra.mxu0 0.0
      %919 = vmatprep.subr.mxu0 0.0
      %920 = vmatpush2.msra.mxu0 0.0
      %921 = vmatprep.subr.mxu0 0.0
      %922 = vmatpush2.msra.mxu0 0.0
      %923 = vmatprep.subr.mxu0 0.0
      %924 = vmatpush2.msra.mxu0 0.0
      %925 = vmatprep.subr.mxu0 0.0
      %926 = vmatpush2.msra.mxu0 0.0
      %927 = vmatprep.subr.mxu0 0.0
      %928 = vmatpush2.msra.mxu0 0.0
      %929 = vmatprep.subr.mxu0 0.0
      %930 = vmatpush2.msra.mxu0 0.0
      %931 = vmatprep.subr.mxu0 0.0
      %932 = vmatpush2.msra.mxu0 0.0
      %933 = vmatprep.subr.mxu0 0.0
      %934 = vmatpush2.msra.mxu0 0.0
      %935 = vmatprep.subr.mxu0 0.0
      %936 = vmatpush2.msra.mxu0 0.0
      %937 = vmatprep.subr.mxu0 0.0
      %938 = vmatpush2.msra.mxu0 0.0
      %939 = vmatprep.subr.mxu0 0.0
      %940 = vmatpush2.msra.mxu0 0.0
      %941 = vmatprep.mubr.f32.mxu0 0.0
      %942 = vmatmul.mubr.f32.gmra.mxu0 %v875
      %v943 = vpop.f32.mrf.mxu0
      %v944 = vadd.f32 0.0, %v943
      %v945 = vpop.f32.mrf.mxu0
      %946 = vdwg.mxu0
      %v947 = vadd.f32 %v874, %v944
      %v948 = vxor.u32 %v947, 2147483648
      %v949 = vmul.f32 %v948, 1.442695
      %v950 = vpow.pop %v949
      %v951 = vadd.f32 %v950, 1.0
      %v952 = vrcp.pop %v951
      %v953 = vmul.f32 1.0, %v952
      %v954 = vtanh.pop %v947
      %v955 = vmul.f32 %v953, %v855
      %957 = vrot.lane.b32.xlu0 %v954, 96
      %v958 = vpop.permute.xlu0 %957
      %v960 = vmul.f32 %v229, %v958
      %v961 = vadd.f32 %v955, %v960
      %v962 = vtanh.pop %v961
      %964 = vrot.lane.b32.xlu0 %v962, 64
      %v965 = vpop.permute.xlu0 %964
      %v967 = vmul.f32 %v953, %v965
      %969 = vrot.lane.b32.xlu0 %v967, 64
      %v970 = vpop.permute.xlu0 %969
      %973 = vrot.lane.b32.xlu0 %v961, 32
      %v974 = vpop.permute.xlu0 %973
      %v976 = vsel %vm237, %v970, %v974
      %s977 = scalar_lea.vmem %s220, 48
      %978 = vst.msk [vmem:[%s977] sm:$0xff] %vm341, %v976
      %s979 = scalar_lea.vmem %s207, 56
      %v980 = vld [vmem:[%s979] sm:$0xff]
      %v981 = vsel %vm237, %v970, 0
      %983 = vmatprep.subr.mxu0 0.0
      %984 = vmatpush1.msra.mxu0 0.0
      %985 = vmatprep.subr.mxu0 0.0
      %986 = vmatpush1.msra.mxu0 0.0
      %987 = vmatprep.subr.mxu0 0.0
      %988 = vmatpush1.msra.mxu0 0.0
      %989 = vmatprep.subr.mxu0 0.0
      %990 = vmatpush1.msra.mxu0 0.0
      %991 = vmatprep.subr.mxu0 0.0
      %992 = vmatpush1.msra.mxu0 0.0
      %993 = vmatprep.subr.mxu0 0.0
      %994 = vmatpush1.msra.mxu0 0.0
      %995 = vmatprep.subr.mxu0 0.0
      %996 = vmatpush1.msra.mxu0 0.0
      %997 = vmatprep.subr.mxu0 0.0
      %998 = vmatpush1.msra.mxu0 0.0
      %999 = vmatprep.subr.mxu0 0.0
      %1000 = vmatpush1.msra.mxu0 0.0
      %1001 = vmatprep.subr.mxu0 0.0
      %1002 = vmatpush1.msra.mxu0 0.0
      %1003 = vmatprep.subr.mxu0 0.0
      %1004 = vmatpush1.msra.mxu0 0.0
      %1005 = vmatprep.subr.mxu0 0.0
      %1006 = vmatpush1.msra.mxu0 0.0
      %1007 = vmatprep.subr.mxu0 0.0
      %1008 = vmatpush1.msra.mxu0 %v233
      %1009 = vmatprep.subr.mxu0 0.0
      %1010 = vmatpush1.msra.mxu0 %v232
      %1011 = vmatprep.subr.mxu0 0.0
      %1012 = vmatpush1.msra.mxu0 %v231
      %1013 = vmatprep.subr.mxu0 0.0
      %1014 = vmatpush1.msra.mxu0 %v230
      %1015 = vmatprep.subr.mxu0 0.0
      %1016 = vmatpush2.msra.mxu0 0.0
      %1017 = vmatprep.subr.mxu0 0.0
      %1018 = vmatpush2.msra.mxu0 0.0
      %1019 = vmatprep.subr.mxu0 0.0
      %1020 = vmatpush2.msra.mxu0 0.0
      %1021 = vmatprep.subr.mxu0 0.0
      %1022 = vmatpush2.msra.mxu0 0.0
      %1023 = vmatprep.subr.mxu0 0.0
      %1024 = vmatpush2.msra.mxu0 0.0
      %1025 = vmatprep.subr.mxu0 0.0
      %1026 = vmatpush2.msra.mxu0 0.0
      %1027 = vmatprep.subr.mxu0 0.0
      %1028 = vmatpush2.msra.mxu0 0.0
      %1029 = vmatprep.subr.mxu0 0.0
      %1030 = vmatpush2.msra.mxu0 0.0
      %1031 = vmatprep.subr.mxu0 0.0
      %1032 = vmatpush2.msra.mxu0 0.0
      %1033 = vmatprep.subr.mxu0 0.0
      %1034 = vmatpush2.msra.mxu0 0.0
      %1035 = vmatprep.subr.mxu0 0.0
      %1036 = vmatpush2.msra.mxu0 0.0
      %1037 = vmatprep.subr.mxu0 0.0
      %1038 = vmatpush2.msra.mxu0 0.0
      %1039 = vmatprep.subr.mxu0 0.0
      %1040 = vmatpush2.msra.mxu0 0.0
      %1041 = vmatprep.subr.mxu0 0.0
      %1042 = vmatpush2.msra.mxu0 0.0
      %1043 = vmatprep.subr.mxu0 0.0
      %1044 = vmatpush2.msra.mxu0 0.0
      %1045 = vmatprep.subr.mxu0 0.0
      %1046 = vmatpush2.msra.mxu0 0.0
      %1047 = vmatprep.mubr.f32.mxu0 0.0
      %1048 = vmatmul.mubr.f32.gmra.mxu0 %v981
      %v1049 = vpop.f32.mrf.mxu0
      %v1050 = vadd.f32 0.0, %v1049
      %v1051 = vpop.f32.mrf.mxu0
      %1052 = vdwg.mxu0
      %v1053 = vadd.f32 %v980, %v1050
      %v1054 = vxor.u32 %v1053, 2147483648
      %v1055 = vmul.f32 %v1054, 1.442695
      %v1056 = vpow.pop %v1055
      %v1057 = vadd.f32 %v1056, 1.0
      %v1058 = vrcp.pop %v1057
      %v1059 = vmul.f32 1.0, %v1058
      %v1060 = vtanh.pop %v1053
      %v1061 = vmul.f32 %v1059, %v961
      %1063 = vrot.lane.b32.xlu0 %v1060, 96
      %v1064 = vpop.permute.xlu0 %1063
      %v1066 = vmul.f32 %v229, %v1064
      %v1067 = vadd.f32 %v1061, %v1066
      %v1068 = vtanh.pop %v1067
      %1070 = vrot.lane.b32.xlu0 %v1068, 64
      %v1071 = vpop.permute.xlu0 %1070
      %v1073 = vmul.f32 %v1059, %v1071
      %1075 = vrot.lane.b32.xlu0 %v1073, 64
      %v1076 = vpop.permute.xlu0 %1075
      %1079 = vrot.lane.b32.xlu0 %v1067, 32
      %v1080 = vpop.permute.xlu0 %1079
      %v1082 = vsel %vm237, %v1076, %v1080
      %s1083 = scalar_lea.vmem %s220, 56
      %1084 = vst.msk [vmem:[%s1083] sm:$0xff] %vm341, %v1082
      %1085 = vst.msk [vmem:[#allocation2] sm:$0xff] %vm237, %v1076
      %1086 = vst.msk [vmem:[#allocation3] sm:$0xff] %vm237, %v1067
      %s1087 = smul.u32 8, %s19
      %p1088 = scmp.lt.s32.totalorder %s1087, 15
      %s1089 = scalar_select %p1088, %s1087, 15
      %p1090 = scmp.lt.s32.totalorder %s18, 0
      %s1091 = scalar_select %p1090, %s18, 0
      %s1092 = sadd.s32 %s1091, %s1089
      %s1093 = smul.addr %s1092, 8
      %s1094 = scalar_lea.vmem %s3, %s1093
      // Predicated region
      $region37: #{ealstm_forward.1} parent=31 // pred_check
        %p1095 = pneg %p121
      $region38: #{ealstm_forward.1} parent=31 // pred_check_branch
        %1097 = sbr.rel (%p1095) target = $region40
      $region39: #{ealstm_forward.1} parent=31 // pred_region
        %s1098 = smul.u32 8, %s19
      $region40: #{ealstm_forward.1} parent=31 // pred_fallthru
        _
    $region32: #{ealstm_forward.1} parent=5 // pred_fallthru
      _
    %p1099 = scmp.le.s32.totalorder 2, %s9
    // Predicated region
    $region41: #{ealstm_forward.1} parent=5 // pred_check
      %p1100 = pneg %p1099
    $region42: #{ealstm_forward.1} parent=5 // pred_check_branch
      %1102 = sbr.rel (%p1100) target = $region44
    $region43: #{ealstm_forward.1} parent=5 // pred_region
      %s1103 = ssub.s32 %s9, 2
      // Predicated region
      $region45: #{ealstm_forward.1} parent=43 // pred_check
        %p1104 = pneg %p127
      $region46: #{ealstm_forward.1} parent=43 // pred_check_branch
        %1106 = sbr.rel (%p1104) target = $region48
      $region47: #{ealstm_forward.1} parent=43 // pred_region
        %s1107 = smul.u32 8, %s21
        %p1108 = scmp.lt.s32.totalorder %s1107, 15
        %s1109 = scalar_select %p1108, %s1107, 15
        %p1110 = scmp.lt.s32.totalorder %s20, 0
        %s1111 = scalar_select %p1110, %s20, 0
        %s1112 = sadd.s32 %s1111, %s1109
        %s1113 = smul.addr %s1112, 8
        %s1114 = scalar_lea.vmem %s3, %s1113
      $region48: #{ealstm_forward.1} parent=43 // pred_fallthru
        _
    $region44: #{ealstm_forward.1} parent=5 // pred_fallthru
      _
  $region6: #{ealstm_forward.1} parent=0 // loop_footer
    %s13 = sadd.s32 1, %s9
  $region7: #{ealstm_forward.1} parent=0 // loop_footer_branch
    %8 = sbr.rel target = $region3
  $region8: #{ealstm_forward.1} parent=0 // loop_exit
    _

</llo_original>
